<compile_context>
chip_gen: v6e
topology: v6e:2x2x1
jax: 0.10.0
libtpu: 0.0.40
codegen_flags: <defaults>
</compile_context>

<pallas_src>
import functools

import jax
import jax.numpy as jnp
import numpy as np
from jax.experimental import pallas as pl
from jax.experimental.pallas import tpu as pltpu

MAX_LENGTH = 10   # L
HIDDEN = 32       # H
OUTPUT = 64       # V (vocab / output_size)
BLK = 128         # lane-aligned width of each fused weight block and of the output slab


# ---------------------------------------------------------------------------
# Kernel: runs all T decode steps in one invocation.
# ---------------------------------------------------------------------------
def attn_decoder_seq_kernel(emb_ref,     # VMEM (T, H)      bf16  pre-gathered embeddings
                            h0_ref,      # VMEM (1, H)      f32   initial GRU hidden
                            enc_ca_ref,  # VMEM (L, H)      bf16  encoder_outputs @ w_ca (pre-folded)
                            w_ref,       # VMEM (H, 4*BLK)  bf16  fused weight slab
                            b_ref,       # VMEM (1, 4*BLK)  f32   fused bias slab
                            out_ref,     # out  (T, BLK)    f32   [logp | h | attn_w | 0]
                            *, T, H, L, V):
    f32, bf16 = jnp.float32, jnp.bfloat16

    # 128-aligned slices of the fused slabs (free views, loaded once).
    w_e   = w_ref[:, 0 * BLK:1 * BLK]   # [attn_e (L) | combine_e (H) | 0]
    w_h   = w_ref[:, 1 * BLK:2 * BLK]   # [gru w_hh (3H, gates r|z|n) | attn_h (L) | 0]
    w_ih  = w_ref[:, 2 * BLK:3 * BLK]   # [gru w_ih (3H) | 0]
    w_out = w_ref[:, 3 * BLK:4 * BLK]   # [out (V) | 0]
    b_e   = b_ref[:, 0 * BLK:1 * BLK]
    b_h   = b_ref[:, 1 * BLK:2 * BLK]
    b_ih  = b_ref[:, 2 * BLK:3 * BLK]
    b_out = b_ref[:, 3 * BLK:4 * BLK]

    enc_ca = enc_ca_ref[...]            # (L, H) bf16

    # ---- prologue: all token-only work, batched over T rows (off the serial chain)
    res_e_all = jnp.dot(emb_ref[...], w_e, preferred_element_type=f32) + b_e   # (T, BLK)

    h = h0_ref[...]                     # (1, H) f32 — recurrent carry as a value
    h_rows, attn_rows = [], []
    for t in range(T):                  # fully unrolled; T is small and static
        res_e = res_e_all[t:t + 1, :]

        # hidden-side matmul: cols [0,3H) = gh (r|z|n, b_hh folded), [3H,3H+L) = attn_h scores
        res_h = jnp.dot(h.astype(bf16), w_h, preferred_element_type=f32) + b_h  # (1, BLK)

        # attention softmax over encoder positions (exact divide).
        scores = res_e[:, :L] + res_h[:, 3 * H:3 * H + L]                        # (1, L)
        e = jnp.exp(scores - jnp.max(scores, axis=-1, keepdims=True))
        attn_w = e / jnp.sum(e, axis=-1, keepdims=True)
        attn_rows.append(attn_w)

        # attn_combine + relu (w_ca pre-folded into enc_ca -> single matmul hop).
        comb = res_e[:, L:L + H] + jnp.dot(attn_w.astype(bf16), enc_ca,
                                           preferred_element_type=f32)           # (1, H)
        x = jnp.maximum(comb, 0.0)

        # single GRU step, PyTorch gate order (r, z, n).
        gi = jnp.dot(x.astype(bf16), w_ih, preferred_element_type=f32) + b_ih    # (1, BLK)
        g = gi + res_h                          # gate columns aligned: one un-shifted add
        r = jax.nn.sigmoid(g[:, :H])
        z = jax.nn.sigmoid(g[:, H:2 * H])
        n = jnp.tanh(gi[:, 2 * H:3 * H] + r * res_h[:, 2 * H:3 * H])
        h = (1.0 - z) * n + z * h
        h_rows.append(h)

    h_all = jnp.concatenate(h_rows, axis=0)         # (T, H)
    attn_all = jnp.concatenate(attn_rows, axis=0)   # (T, L)

    # ---- epilogue: deferred output projection + log-softmax, all T rows at once.
    logits = (jnp.dot(h_all.astype(bf16), w_out, preferred_element_type=f32) + b_out)[:, :V]
    shifted = logits - jnp.max(logits, axis=-1, keepdims=True)
    logp = shifted - jnp.log(jnp.sum(jnp.exp(shifted), axis=-1, keepdims=True))  # (T, V)

    # single lane-dense writeback: [logp | h | attn_w | 0-pad] -> (T, 128)
    pad = jnp.zeros((T, BLK - (V + H + L)), f32)
    out_ref[...] = jnp.concatenate([logp, h_all, attn_all, pad], axis=1)


# ---------------------------------------------------------------------------
# Parameters: PyTorch-native layout + packed kernel layout.
# ---------------------------------------------------------------------------
def make_params(key, hidden_size=HIDDEN, output_size=OUTPUT, max_length=MAX_LENGTH):
    """Deterministic synthetic parameters in PyTorch-native shapes (f32)."""
    H, V, L = hidden_size, output_size, max_length
    ks = jax.random.split(key, 11)
    s = 0.1
    return dict(
        emb=jax.random.normal(ks[0], (V, H), jnp.float32) * s,          # nn.Embedding
        w_attn=jax.random.normal(ks[1], (L, 2 * H), jnp.float32) * s,   # Linear(2H -> L)
        b_attn=jax.random.normal(ks[2], (L,), jnp.float32) * s,
        w_comb=jax.random.normal(ks[3], (H, 2 * H), jnp.float32) * s,   # Linear(2H -> H)
        b_comb=jax.random.normal(ks[4], (H,), jnp.float32) * s,
        w_ih=jax.random.normal(ks[5], (3 * H, H), jnp.float32) * s,     # GRU weight_ih_l0
        b_ih=jax.random.normal(ks[6], (3 * H,), jnp.float32) * s,
        w_hh=jax.random.normal(ks[7], (3 * H, H), jnp.float32) * s,     # GRU weight_hh_l0
        b_hh=jax.random.normal(ks[8], (3 * H,), jnp.float32) * s,
        w_out=jax.random.normal(ks[9], (V, H), jnp.float32) * s,        # Linear(H -> V)
        b_out=jax.random.normal(ks[10], (V,), jnp.float32) * s,
    )


def pack_params(native, hidden_size=HIDDEN, output_size=OUTPUT, max_length=MAX_LENGTH):
    """Pack into the fused, 128-aligned kernel layout (weights bf16, biases f32)."""
    H, V, L = hidden_size, output_size, max_length

    def padw(x):  # (H, n) -> (H, BLK)
        return jnp.pad(x, ((0, 0), (0, BLK - x.shape[1])))

    def padb(x):  # (n,)  -> (1, BLK)
        return jnp.pad(x, (0, BLK - x.shape[0])).reshape(1, BLK)

    w_attn, w_comb = native["w_attn"], native["w_comb"]
    # block 0 (LHS = embedded):      [attn_e | combine_e | 0]
    w_blk0 = padw(jnp.concatenate([w_attn[:, :H].T, w_comb[:, :H].T], axis=1))
    b_blk0 = padb(jnp.concatenate([native["b_attn"], native["b_comb"]]))
    # block 1 (LHS = hidden):        [gru w_hh (r|z|n) | attn_h | 0]   (b_hh folded)
    w_blk1 = padw(jnp.concatenate([native["w_hh"].T, w_attn[:, H:].T], axis=1))
    b_blk1 = padb(jnp.concatenate([native["b_hh"], jnp.zeros((L,), jnp.float32)]))
    # block 2 (LHS = relu(combine)): [gru w_ih (r|z|n) | 0]
    w_blk2 = padw(native["w_ih"].T)
    b_blk2 = padb(native["b_ih"])
    # block 3 (LHS = new hidden):    [w_out | 0]
    w_blk3 = padw(native["w_out"].T)
    b_blk3 = padb(native["b_out"])

    return dict(
        emb=native["emb"],                                   # (V, H) f32 (gathered in wrapper)
        w_ca=native["w_comb"][:, H:].T,                      # (H, H) f32 (folded into enc in wrapper)
        w_slab=jnp.concatenate([w_blk0, w_blk1, w_blk2, w_blk3],
                               axis=1).astype(jnp.bfloat16),  # (H, 4*BLK)
        b_slab=jnp.concatenate([b_blk0, b_blk1, b_blk2, b_blk3],
                               axis=1).astype(jnp.float32),   # (1, 4*BLK)
    )


# ---------------------------------------------------------------------------
# Wrappers
# ---------------------------------------------------------------------------
@jax.jit
def attn_decoder_forward_seq(tokens, hidden, encoder_outputs, params):
    """Run T decoder steps (teacher-forced token sequence) in ONE pallas_call.

    tokens: (T,) int32; hidden: (1,1,H); encoder_outputs: (L,H).
    Returns (log_probs (T,V), hidden_seq (T,H), attn_weights (T,L)).
    """
    T = tokens.shape[0]
    H = hidden.shape[-1]
    L = encoder_outputs.shape[0]
    V = params["emb"].shape[0]

    # Token gather and w_ca fold hoisted out of the recurrence (cheap one-off XLA ops).
    emb_seq = params["emb"][tokens.astype(jnp.int32)].astype(jnp.bfloat16)     # (T, H)
    enc_ca = jnp.dot(encoder_outputs, params["w_ca"]).astype(jnp.bfloat16)     # (L, H)

    out = pl.pallas_call(
        functools.partial(attn_decoder_seq_kernel, T=T, H=H, L=L, V=V),
        out_shape=jax.ShapeDtypeStruct((T, BLK), jnp.float32),
        in_specs=[pl.BlockSpec(memory_space=pltpu.MemorySpace.VMEM)] * 5,
        out_specs=pl.BlockSpec(memory_space=pltpu.MemorySpace.VMEM),
    )(emb_seq,
      hidden.reshape(1, H).astype(jnp.float32),
      enc_ca,
      params["w_slab"],
      params["b_slab"])

    logp = out[:, :V]
    h_seq = out[:, V:V + H]
    attn_w = out[:, V + H:V + H + L]
    return logp, h_seq, attn_w


def attn_decoder_forward(tok, hidden, encoder_outputs, params):
    """Single decode step — same signature/semantics as AttnDecoderRNN.forward."""
    H = hidden.shape[-1]
    logp, h_seq, attn_w = attn_decoder_forward_seq(
        jnp.asarray(tok).reshape((1,)).astype(jnp.int32), hidden, encoder_outputs, params)
    return logp, h_seq.reshape(1, 1, H), attn_w


# ---------------------------------------------------------------------------
# Pure-f32, PyTorch-faithful reference (for correctness checking).
# ---------------------------------------------------------------------------
def reference_seq(tokens, hidden, encoder_outputs, native):
    H = hidden.shape[-1]
    h = hidden.reshape(1, H)
    logps, hs, atts = [], [], []
    for t in range(int(tokens.shape[0])):
        emb = native["emb"][int(tokens[t])][None, :]
        score = jnp.concatenate([emb, h], axis=1) @ native["w_attn"].T + native["b_attn"]
        attn_w = jax.nn.softmax(score, axis=-1)
        attn_applied = attn_w @ encoder_outputs
        comb = (jnp.concatenate([emb, attn_applied], axis=1) @ native["w_comb"].T
                + native["b_comb"])
        x = jnp.maximum(comb, 0.0)
        gi = x @ native["w_ih"].T + native["b_ih"]
        gh = h @ native["w_hh"].T + native["b_hh"]
        r = jax.nn.sigmoid(gi[:, :H] + gh[:, :H])
        z = jax.nn.sigmoid(gi[:, H:2 * H] + gh[:, H:2 * H])
        n = jnp.tanh(gi[:, 2 * H:] + r * gh[:, 2 * H:])
        h = (1.0 - z) * n + z * h
        logits = h @ native["w_out"].T + native["b_out"]
        logps.append(jax.nn.log_softmax(logits, axis=-1))
        hs.append(h)
        atts.append(attn_w)
    return (jnp.concatenate(logps, axis=0),
            jnp.concatenate(hs, axis=0),
            jnp.concatenate(atts, axis=0))


if __name__ == "__main__":
    key = jax.random.PRNGKey(0)
    kp, kh, ke = jax.random.split(key, 3)

    native = make_params(kp)
    params = pack_params(native)

    hidden0 = jax.random.normal(kh, (1, 1, HIDDEN), jnp.float32) * 0.1
    encoder_outputs = jax.random.normal(ke, (MAX_LENGTH, HIDDEN), jnp.float32) * 0.1

    # ---- multi-step decode: one pallas_call, weights VMEM-resident, single writeback
    tokens = jnp.array([3, 1, 4, 1, 5, 9], dtype=jnp.int32) % OUTPUT
    T = int(tokens.shape[0])
    logp_seq, h_seq, attn_seq = attn_decoder_forward_seq(tokens, hidden0, encoder_outputs, params)
    jax.block_until_ready((logp_seq, h_seq, attn_seq))

    assert logp_seq.shape == (T, OUTPUT)
    assert h_seq.shape == (T, HIDDEN)
    assert attn_seq.shape == (T, MAX_LENGTH)

    # probability sanity (exact f32 softmax / log-softmax in-kernel)
    assert np.allclose(np.sum(np.asarray(attn_seq), axis=-1), 1.0, atol=1e-4)
    assert np.allclose(np.sum(np.exp(np.asarray(logp_seq)), axis=-1), 1.0, atol=1e-4)

    # numerics vs pure-f32 PyTorch-faithful reference (kernel uses bf16 weights on the MXU)
    ref_logp, ref_h, ref_attn = reference_seq(tokens, hidden0, encoder_outputs, native)
    assert np.allclose(np.asarray(logp_seq), np.asarray(ref_logp), atol=2e-2)
    assert np.allclose(np.asarray(h_seq), np.asarray(ref_h), atol=2e-2)
    assert np.allclose(np.asarray(attn_seq), np.asarray(ref_attn), atol=2e-2)

    # ---- single-step API, matching AttnDecoderRNN.forward ------------------------
    out, new_hidden, attn_weights = attn_decoder_forward(
        tokens[0:1], hidden0, encoder_outputs, params)
    jax.block_until_ready((out, new_hidden, attn_weights))
    assert out.shape == (1, OUTPUT)
    assert new_hidden.shape == (1, 1, HIDDEN)
    assert attn_weights.shape == (1, MAX_LENGTH)
    assert np.allclose(np.asarray(out), np.asarray(logp_seq[0:1]), atol=1e-3)
    assert np.allclose(np.asarray(new_hidden).reshape(1, HIDDEN),
                       np.asarray(h_seq[0:1]), atol=1e-3)

    print("KERNEL_OK")
</pallas_src>

<mosaic_0001>
module attributes {stable_mosaic.version = 11 : i64} {
  func.func @attn_decoder_seq_kernel(%arg0: memref<6x32xbf16, #tpu.memory_space<vmem>>, %arg1: memref<1x32xf32, #tpu.memory_space<vmem>>, %arg2: memref<10x32xbf16, #tpu.memory_space<vmem>>, %arg3: memref<32x512xbf16, #tpu.memory_space<vmem>>, %arg4: memref<1x512xf32, #tpu.memory_space<vmem>>, %arg5: memref<6x128xf32, #tpu.memory_space<vmem>>) attributes {dimension_semantics = [], scalar_prefetch = 0 : i64, scratch_operands = 0 : i64, tpu.core_type = #tpu.core_type<tc>} {
    %c0 = arith.constant 0 : index
    %c0_0 = arith.constant 0 : index
    %0 = vector.load %arg3[%c0, %c0_0] : memref<32x512xbf16, #tpu.memory_space<vmem>>, vector<32x128xbf16>
    %c0_1 = arith.constant 0 : index
    %c128 = arith.constant 128 : index
    %1 = vector.load %arg3[%c0_1, %c128] : memref<32x512xbf16, #tpu.memory_space<vmem>>, vector<32x128xbf16>
    %c0_2 = arith.constant 0 : index
    %c256 = arith.constant 256 : index
    %2 = vector.load %arg3[%c0_2, %c256] : memref<32x512xbf16, #tpu.memory_space<vmem>>, vector<32x128xbf16>
    %c0_3 = arith.constant 0 : index
    %c384 = arith.constant 384 : index
    %3 = vector.load %arg3[%c0_3, %c384] : memref<32x512xbf16, #tpu.memory_space<vmem>>, vector<32x128xbf16>
    %c0_4 = arith.constant 0 : index
    %c0_5 = arith.constant 0 : index
    %4 = vector.load %arg4[%c0_4, %c0_5] : memref<1x512xf32, #tpu.memory_space<vmem>>, vector<1x128xf32>
    %c0_6 = arith.constant 0 : index
    %c128_7 = arith.constant 128 : index
    %5 = vector.load %arg4[%c0_6, %c128_7] : memref<1x512xf32, #tpu.memory_space<vmem>>, vector<1x128xf32>
    %c0_8 = arith.constant 0 : index
    %c256_9 = arith.constant 256 : index
    %6 = vector.load %arg4[%c0_8, %c256_9] : memref<1x512xf32, #tpu.memory_space<vmem>>, vector<1x128xf32>
    %c0_10 = arith.constant 0 : index
    %c384_11 = arith.constant 384 : index
    %7 = vector.load %arg4[%c0_10, %c384_11] : memref<1x512xf32, #tpu.memory_space<vmem>>, vector<1x128xf32>
    %c0_12 = arith.constant 0 : index
    %c0_13 = arith.constant 0 : index
    %8 = vector.load %arg2[%c0_12, %c0_13] : memref<10x32xbf16, #tpu.memory_space<vmem>>, vector<10x32xbf16>
    %c0_14 = arith.constant 0 : index
    %c0_15 = arith.constant 0 : index
    %9 = vector.load %arg0[%c0_14, %c0_15] : memref<6x32xbf16, #tpu.memory_space<vmem>>, vector<6x32xbf16>
    %cst = arith.constant dense<0.000000e+00> : vector<6x128xf32>
    %10 = tpu.matmul %9, %0, %cst {dimension_numbers = #tpu.dot_dimension_numbers<[1], [0], [0], [1], [0, 0, 1, 1], [], []>} : vector<6x32xbf16>, vector<32x128xbf16>, vector<6x128xf32> -> vector<6x128xf32>
    %11 = vector.broadcast %4 : vector<1x128xf32> to vector<6x128xf32>
    %12 = arith.addf %10, %11 : vector<6x128xf32>
    %c0_16 = arith.constant 0 : index
    %c0_17 = arith.constant 0 : index
    %13 = vector.load %arg1[%c0_16, %c0_17] : memref<1x32xf32, #tpu.memory_space<vmem>>, vector<1x32xf32>
    %14 = vector.extract_strided_slice %12 {offsets = [0, 0], sizes = [1, 128], strides = [1, 1]} : vector<6x128xf32> to vector<1x128xf32>
    %15 = arith.truncf %13 : vector<1x32xf32> to vector<1x32xbf16>
    %cst_18 = arith.constant dense<0.000000e+00> : vector<1x128xf32>
    %16 = tpu.matmul %15, %1, %cst_18 {dimension_numbers = #tpu.dot_dimension_numbers<[1], [0], [0], [1], [0, 0, 1, 1], [], []>} : vector<1x32xbf16>, vector<32x128xbf16>, vector<1x128xf32> -> vector<1x128xf32>
    %17 = arith.addf %16, %5 : vector<1x128xf32>
    %18 = vector.extract_strided_slice %14 {offsets = [0, 0], sizes = [1, 10], strides = [1, 1]} : vector<1x128xf32> to vector<1x10xf32>
    %19 = vector.extract_strided_slice %17 {offsets = [0, 96], sizes = [1, 10], strides = [1, 1]} : vector<1x128xf32> to vector<1x10xf32>
    %20 = arith.addf %18, %19 : vector<1x10xf32>
    %cst_19 = arith.constant dense<0xFF800000> : vector<1xf32>
    %21 = vector.multi_reduction <maximumf>, %20, %cst_19 [1] : vector<1x10xf32> to vector<1xf32>
    %22 = vector.shape_cast %21 : vector<1xf32> to vector<1x1xf32>
    %23 = vector.broadcast %22 : vector<1x1xf32> to vector<1x10xf32>
    %24 = arith.subf %20, %23 : vector<1x10xf32>
    %25 = math.exp %24 : vector<1x10xf32>
    %cst_20 = arith.constant dense<0.000000e+00> : vector<1xf32>
    %26 = vector.multi_reduction <add>, %25, %cst_20 [1] : vector<1x10xf32> to vector<1xf32>
    %27 = vector.shape_cast %26 : vector<1xf32> to vector<1x1xf32>
    %28 = vector.broadcast %27 : vector<1x1xf32> to vector<1x10xf32>
    %29 = arith.divf %25, %28 : vector<1x10xf32>
    %30 = vector.extract_strided_slice %14 {offsets = [0, 10], sizes = [1, 32], strides = [1, 1]} : vector<1x128xf32> to vector<1x32xf32>
    %31 = arith.truncf %29 : vector<1x10xf32> to vector<1x10xbf16>
    %cst_21 = arith.constant dense<0.000000e+00> : vector<1x32xf32>
    %32 = tpu.matmul %31, %8, %cst_21 {dimension_numbers = #tpu.dot_dimension_numbers<[1], [0], [0], [1], [0, 0, 1, 1], [], []>} : vector<1x10xbf16>, vector<10x32xbf16>, vector<1x32xf32> -> vector<1x32xf32>
    %33 = arith.addf %30, %32 : vector<1x32xf32>
    %cst_22 = arith.constant 0.000000e+00 : f32
    %34 = vector.broadcast %cst_22 : f32 to vector<1x32xf32>
    %35 = arith.maximumf %33, %34 : vector<1x32xf32>
    %36 = arith.truncf %35 : vector<1x32xf32> to vector<1x32xbf16>
    %cst_23 = arith.constant dense<0.000000e+00> : vector<1x128xf32>
    %37 = tpu.matmul %36, %2, %cst_23 {dimension_numbers = #tpu.dot_dimension_numbers<[1], [0], [0], [1], [0, 0, 1, 1], [], []>} : vector<1x32xbf16>, vector<32x128xbf16>, vector<1x128xf32> -> vector<1x128xf32>
    %38 = arith.addf %37, %6 : vector<1x128xf32>
    %39 = arith.addf %38, %17 : vector<1x128xf32>
    %40 = vector.extract_strided_slice %39 {offsets = [0, 0], sizes = [1, 32], strides = [1, 1]} : vector<1x128xf32> to vector<1x32xf32>
    %41 = arith.negf %40 : vector<1x32xf32>
    %42 = math.exp %41 : vector<1x32xf32>
    %cst_24 = arith.constant 1.000000e+00 : f32
    %43 = vector.broadcast %cst_24 : f32 to vector<1x32xf32>
    %44 = arith.addf %43, %42 : vector<1x32xf32>
    %45 = arith.divf %43, %44 : vector<1x32xf32>
    %46 = vector.extract_strided_slice %39 {offsets = [0, 32], sizes = [1, 32], strides = [1, 1]} : vector<1x128xf32> to vector<1x32xf32>
    %47 = arith.negf %46 : vector<1x32xf32>
    %48 = math.exp %47 : vector<1x32xf32>
    %cst_25 = arith.constant 1.000000e+00 : f32
    %49 = vector.broadcast %cst_25 : f32 to vector<1x32xf32>
    %50 = arith.addf %49, %48 : vector<1x32xf32>
    %51 = arith.divf %49, %50 : vector<1x32xf32>
    %52 = vector.extract_strided_slice %38 {offsets = [0, 64], sizes = [1, 32], strides = [1, 1]} : vector<1x128xf32> to vector<1x32xf32>
    %53 = vector.extract_strided_slice %17 {offsets = [0, 64], sizes = [1, 32], strides = [1, 1]} : vector<1x128xf32> to vector<1x32xf32>
    %54 = arith.mulf %45, %53 : vector<1x32xf32>
    %55 = arith.addf %52, %54 : vector<1x32xf32>
    %56 = math.tanh %55 : vector<1x32xf32>
    %cst_26 = arith.constant 1.000000e+00 : f32
    %57 = vector.broadcast %cst_26 : f32 to vector<1x32xf32>
    %58 = arith.subf %57, %51 : vector<1x32xf32>
    %59 = arith.mulf %58, %56 : vector<1x32xf32>
    %60 = arith.mulf %51, %13 : vector<1x32xf32>
    %61 = arith.addf %59, %60 : vector<1x32xf32>
    %62 = vector.extract_strided_slice %12 {offsets = [1, 0], sizes = [1, 128], strides = [1, 1]} : vector<6x128xf32> to vector<1x128xf32>
    %63 = arith.truncf %61 : vector<1x32xf32> to vector<1x32xbf16>
    %cst_27 = arith.constant dense<0.000000e+00> : vector<1x128xf32>
    %64 = tpu.matmul %63, %1, %cst_27 {dimension_numbers = #tpu.dot_dimension_numbers<[1], [0], [0], [1], [0, 0, 1, 1], [], []>} : vector<1x32xbf16>, vector<32x128xbf16>, vector<1x128xf32> -> vector<1x128xf32>
    %65 = arith.addf %64, %5 : vector<1x128xf32>
    %66 = vector.extract_strided_slice %62 {offsets = [0, 0], sizes = [1, 10], strides = [1, 1]} : vector<1x128xf32> to vector<1x10xf32>
    %67 = vector.extract_strided_slice %65 {offsets = [0, 96], sizes = [1, 10], strides = [1, 1]} : vector<1x128xf32> to vector<1x10xf32>
    %68 = arith.addf %66, %67 : vector<1x10xf32>
    %cst_28 = arith.constant dense<0xFF800000> : vector<1xf32>
    %69 = vector.multi_reduction <maximumf>, %68, %cst_28 [1] : vector<1x10xf32> to vector<1xf32>
    %70 = vector.shape_cast %69 : vector<1xf32> to vector<1x1xf32>
    %71 = vector.broadcast %70 : vector<1x1xf32> to vector<1x10xf32>
    %72 = arith.subf %68, %71 : vector<1x10xf32>
    %73 = math.exp %72 : vector<1x10xf32>
    %cst_29 = arith.constant dense<0.000000e+00> : vector<1xf32>
    %74 = vector.multi_reduction <add>, %73, %cst_29 [1] : vector<1x10xf32> to vector<1xf32>
    %75 = vector.shape_cast %74 : vector<1xf32> to vector<1x1xf32>
    %76 = vector.broadcast %75 : vector<1x1xf32> to vector<1x10xf32>
    %77 = arith.divf %73, %76 : vector<1x10xf32>
    %78 = vector.extract_strided_slice %62 {offsets = [0, 10], sizes = [1, 32], strides = [1, 1]} : vector<1x128xf32> to vector<1x32xf32>
    %79 = arith.truncf %77 : vector<1x10xf32> to vector<1x10xbf16>
    %cst_30 = arith.constant dense<0.000000e+00> : vector<1x32xf32>
    %80 = tpu.matmul %79, %8, %cst_30 {dimension_numbers = #tpu.dot_dimension_numbers<[1], [0], [0], [1], [0, 0, 1, 1], [], []>} : vector<1x10xbf16>, vector<10x32xbf16>, vector<1x32xf32> -> vector<1x32xf32>
    %81 = arith.addf %78, %80 : vector<1x32xf32>
    %cst_31 = arith.constant 0.000000e+00 : f32
    %82 = vector.broadcast %cst_31 : f32 to vector<1x32xf32>
    %83 = arith.maximumf %81, %82 : vector<1x32xf32>
    %84 = arith.truncf %83 : vector<1x32xf32> to vector<1x32xbf16>
    %cst_32 = arith.constant dense<0.000000e+00> : vector<1x128xf32>
    %85 = tpu.matmul %84, %2, %cst_32 {dimension_numbers = #tpu.dot_dimension_numbers<[1], [0], [0], [1], [0, 0, 1, 1], [], []>} : vector<1x32xbf16>, vector<32x128xbf16>, vector<1x128xf32> -> vector<1x128xf32>
    %86 = arith.addf %85, %6 : vector<1x128xf32>
    %87 = arith.addf %86, %65 : vector<1x128xf32>
    %88 = vector.extract_strided_slice %87 {offsets = [0, 0], sizes = [1, 32], strides = [1, 1]} : vector<1x128xf32> to vector<1x32xf32>
    %89 = arith.negf %88 : vector<1x32xf32>
    %90 = math.exp %89 : vector<1x32xf32>
    %cst_33 = arith.constant 1.000000e+00 : f32
    %91 = vector.broadcast %cst_33 : f32 to vector<1x32xf32>
    %92 = arith.addf %91, %90 : vector<1x32xf32>
    %93 = arith.divf %91, %92 : vector<1x32xf32>
    %94 = vector.extract_strided_slice %87 {offsets = [0, 32], sizes = [1, 32], strides = [1, 1]} : vector<1x128xf32> to vector<1x32xf32>
    %95 = arith.negf %94 : vector<1x32xf32>
    %96 = math.exp %95 : vector<1x32xf32>
    %cst_34 = arith.constant 1.000000e+00 : f32
    %97 = vector.broadcast %cst_34 : f32 to vector<1x32xf32>
    %98 = arith.addf %97, %96 : vector<1x32xf32>
    %99 = arith.divf %97, %98 : vector<1x32xf32>
    %100 = vector.extract_strided_slice %86 {offsets = [0, 64], sizes = [1, 32], strides = [1, 1]} : vector<1x128xf32> to vector<1x32xf32>
    %101 = vector.extract_strided_slice %65 {offsets = [0, 64], sizes = [1, 32], strides = [1, 1]} : vector<1x128xf32> to vector<1x32xf32>
    %102 = arith.mulf %93, %101 : vector<1x32xf32>
    %103 = arith.addf %100, %102 : vector<1x32xf32>
    %104 = math.tanh %103 : vector<1x32xf32>
    %cst_35 = arith.constant 1.000000e+00 : f32
    %105 = vector.broadcast %cst_35 : f32 to vector<1x32xf32>
    %106 = arith.subf %105, %99 : vector<1x32xf32>
    %107 = arith.mulf %106, %104 : vector<1x32xf32>
    %108 = arith.mulf %99, %61 : vector<1x32xf32>
    %109 = arith.addf %107, %108 : vector<1x32xf32>
    %110 = vector.extract_strided_slice %12 {offsets = [2, 0], sizes = [1, 128], strides = [1, 1]} : vector<6x128xf32> to vector<1x128xf32>
    %111 = arith.truncf %109 : vector<1x32xf32> to vector<1x32xbf16>
    %cst_36 = arith.constant dense<0.000000e+00> : vector<1x128xf32>
    %112 = tpu.matmul %111, %1, %cst_36 {dimension_numbers = #tpu.dot_dimension_numbers<[1], [0], [0], [1], [0, 0, 1, 1], [], []>} : vector<1x32xbf16>, vector<32x128xbf16>, vector<1x128xf32> -> vector<1x128xf32>
    %113 = arith.addf %112, %5 : vector<1x128xf32>
    %114 = vector.extract_strided_slice %110 {offsets = [0, 0], sizes = [1, 10], strides = [1, 1]} : vector<1x128xf32> to vector<1x10xf32>
    %115 = vector.extract_strided_slice %113 {offsets = [0, 96], sizes = [1, 10], strides = [1, 1]} : vector<1x128xf32> to vector<1x10xf32>
    %116 = arith.addf %114, %115 : vector<1x10xf32>
    %cst_37 = arith.constant dense<0xFF800000> : vector<1xf32>
    %117 = vector.multi_reduction <maximumf>, %116, %cst_37 [1] : vector<1x10xf32> to vector<1xf32>
    %118 = vector.shape_cast %117 : vector<1xf32> to vector<1x1xf32>
    %119 = vector.broadcast %118 : vector<1x1xf32> to vector<1x10xf32>
    %120 = arith.subf %116, %119 : vector<1x10xf32>
    %121 = math.exp %120 : vector<1x10xf32>
    %cst_38 = arith.constant dense<0.000000e+00> : vector<1xf32>
    %122 = vector.multi_reduction <add>, %121, %cst_38 [1] : vector<1x10xf32> to vector<1xf32>
    %123 = vector.shape_cast %122 : vector<1xf32> to vector<1x1xf32>
    %124 = vector.broadcast %123 : vector<1x1xf32> to vector<1x10xf32>
    %125 = arith.divf %121, %124 : vector<1x10xf32>
    %126 = vector.extract_strided_slice %110 {offsets = [0, 10], sizes = [1, 32], strides = [1, 1]} : vector<1x128xf32> to vector<1x32xf32>
    %127 = arith.truncf %125 : vector<1x10xf32> to vector<1x10xbf16>
    %cst_39 = arith.constant dense<0.000000e+00> : vector<1x32xf32>
    %128 = tpu.matmul %127, %8, %cst_39 {dimension_numbers = #tpu.dot_dimension_numbers<[1], [0], [0], [1], [0, 0, 1, 1], [], []>} : vector<1x10xbf16>, vector<10x32xbf16>, vector<1x32xf32> -> vector<1x32xf32>
    %129 = arith.addf %126, %128 : vector<1x32xf32>
    %cst_40 = arith.constant 0.000000e+00 : f32
    %130 = vector.broadcast %cst_40 : f32 to vector<1x32xf32>
    %131 = arith.maximumf %129, %130 : vector<1x32xf32>
    %132 = arith.truncf %131 : vector<1x32xf32> to vector<1x32xbf16>
    %cst_41 = arith.constant dense<0.000000e+00> : vector<1x128xf32>
    %133 = tpu.matmul %132, %2, %cst_41 {dimension_numbers = #tpu.dot_dimension_numbers<[1], [0], [0], [1], [0, 0, 1, 1], [], []>} : vector<1x32xbf16>, vector<32x128xbf16>, vector<1x128xf32> -> vector<1x128xf32>
    %134 = arith.addf %133, %6 : vector<1x128xf32>
    %135 = arith.addf %134, %113 : vector<1x128xf32>
    %136 = vector.extract_strided_slice %135 {offsets = [0, 0], sizes = [1, 32], strides = [1, 1]} : vector<1x128xf32> to vector<1x32xf32>
    %137 = arith.negf %136 : vector<1x32xf32>
    %138 = math.exp %137 : vector<1x32xf32>
    %cst_42 = arith.constant 1.000000e+00 : f32
    %139 = vector.broadcast %cst_42 : f32 to vector<1x32xf32>
    %140 = arith.addf %139, %138 : vector<1x32xf32>
    %141 = arith.divf %139, %140 : vector<1x32xf32>
    %142 = vector.extract_strided_slice %135 {offsets = [0, 32], sizes = [1, 32], strides = [1, 1]} : vector<1x128xf32> to vector<1x32xf32>
    %143 = arith.negf %142 : vector<1x32xf32>
    %144 = math.exp %143 : vector<1x32xf32>
    %cst_43 = arith.constant 1.000000e+00 : f32
    %145 = vector.broadcast %cst_43 : f32 to vector<1x32xf32>
    %146 = arith.addf %145, %144 : vector<1x32xf32>
    %147 = arith.divf %145, %146 : vector<1x32xf32>
    %148 = vector.extract_strided_slice %134 {offsets = [0, 64], sizes = [1, 32], strides = [1, 1]} : vector<1x128xf32> to vector<1x32xf32>
    %149 = vector.extract_strided_slice %113 {offsets = [0, 64], sizes = [1, 32], strides = [1, 1]} : vector<1x128xf32> to vector<1x32xf32>
    %150 = arith.mulf %141, %149 : vector<1x32xf32>
    %151 = arith.addf %148, %150 : vector<1x32xf32>
    %152 = math.tanh %151 : vector<1x32xf32>
    %cst_44 = arith.constant 1.000000e+00 : f32
    %153 = vector.broadcast %cst_44 : f32 to vector<1x32xf32>
    %154 = arith.subf %153, %147 : vector<1x32xf32>
    %155 = arith.mulf %154, %152 : vector<1x32xf32>
    %156 = arith.mulf %147, %109 : vector<1x32xf32>
    %157 = arith.addf %155, %156 : vector<1x32xf32>
    %158 = vector.extract_strided_slice %12 {offsets = [3, 0], sizes = [1, 128], strides = [1, 1]} : vector<6x128xf32> to vector<1x128xf32>
    %159 = arith.truncf %157 : vector<1x32xf32> to vector<1x32xbf16>
    %cst_45 = arith.constant dense<0.000000e+00> : vector<1x128xf32>
    %160 = tpu.matmul %159, %1, %cst_45 {dimension_numbers = #tpu.dot_dimension_numbers<[1], [0], [0], [1], [0, 0, 1, 1], [], []>} : vector<1x32xbf16>, vector<32x128xbf16>, vector<1x128xf32> -> vector<1x128xf32>
    %161 = arith.addf %160, %5 : vector<1x128xf32>
    %162 = vector.extract_strided_slice %158 {offsets = [0, 0], sizes = [1, 10], strides = [1, 1]} : vector<1x128xf32> to vector<1x10xf32>
    %163 = vector.extract_strided_slice %161 {offsets = [0, 96], sizes = [1, 10], strides = [1, 1]} : vector<1x128xf32> to vector<1x10xf32>
    %164 = arith.addf %162, %163 : vector<1x10xf32>
    %cst_46 = arith.constant dense<0xFF800000> : vector<1xf32>
    %165 = vector.multi_reduction <maximumf>, %164, %cst_46 [1] : vector<1x10xf32> to vector<1xf32>
    %166 = vector.shape_cast %165 : vector<1xf32> to vector<1x1xf32>
    %167 = vector.broadcast %166 : vector<1x1xf32> to vector<1x10xf32>
    %168 = arith.subf %164, %167 : vector<1x10xf32>
    %169 = math.exp %168 : vector<1x10xf32>
    %cst_47 = arith.constant dense<0.000000e+00> : vector<1xf32>
    %170 = vector.multi_reduction <add>, %169, %cst_47 [1] : vector<1x10xf32> to vector<1xf32>
    %171 = vector.shape_cast %170 : vector<1xf32> to vector<1x1xf32>
    %172 = vector.broadcast %171 : vector<1x1xf32> to vector<1x10xf32>
    %173 = arith.divf %169, %172 : vector<1x10xf32>
    %174 = vector.extract_strided_slice %158 {offsets = [0, 10], sizes = [1, 32], strides = [1, 1]} : vector<1x128xf32> to vector<1x32xf32>
    %175 = arith.truncf %173 : vector<1x10xf32> to vector<1x10xbf16>
    %cst_48 = arith.constant dense<0.000000e+00> : vector<1x32xf32>
    %176 = tpu.matmul %175, %8, %cst_48 {dimension_numbers = #tpu.dot_dimension_numbers<[1], [0], [0], [1], [0, 0, 1, 1], [], []>} : vector<1x10xbf16>, vector<10x32xbf16>, vector<1x32xf32> -> vector<1x32xf32>
    %177 = arith.addf %174, %176 : vector<1x32xf32>
    %cst_49 = arith.constant 0.000000e+00 : f32
    %178 = vector.broadcast %cst_49 : f32 to vector<1x32xf32>
    %179 = arith.maximumf %177, %178 : vector<1x32xf32>
    %180 = arith.truncf %179 : vector<1x32xf32> to vector<1x32xbf16>
    %cst_50 = arith.constant dense<0.000000e+00> : vector<1x128xf32>
    %181 = tpu.matmul %180, %2, %cst_50 {dimension_numbers = #tpu.dot_dimension_numbers<[1], [0], [0], [1], [0, 0, 1, 1], [], []>} : vector<1x32xbf16>, vector<32x128xbf16>, vector<1x128xf32> -> vector<1x128xf32>
    %182 = arith.addf %181, %6 : vector<1x128xf32>
    %183 = arith.addf %182, %161 : vector<1x128xf32>
    %184 = vector.extract_strided_slice %183 {offsets = [0, 0], sizes = [1, 32], strides = [1, 1]} : vector<1x128xf32> to vector<1x32xf32>
    %185 = arith.negf %184 : vector<1x32xf32>
    %186 = math.exp %185 : vector<1x32xf32>
    %cst_51 = arith.constant 1.000000e+00 : f32
    %187 = vector.broadcast %cst_51 : f32 to vector<1x32xf32>
    %188 = arith.addf %187, %186 : vector<1x32xf32>
    %189 = arith.divf %187, %188 : vector<1x32xf32>
    %190 = vector.extract_strided_slice %183 {offsets = [0, 32], sizes = [1, 32], strides = [1, 1]} : vector<1x128xf32> to vector<1x32xf32>
    %191 = arith.negf %190 : vector<1x32xf32>
    %192 = math.exp %191 : vector<1x32xf32>
    %cst_52 = arith.constant 1.000000e+00 : f32
    %193 = vector.broadcast %cst_52 : f32 to vector<1x32xf32>
    %194 = arith.addf %193, %192 : vector<1x32xf32>
    %195 = arith.divf %193, %194 : vector<1x32xf32>
    %196 = vector.extract_strided_slice %182 {offsets = [0, 64], sizes = [1, 32], strides = [1, 1]} : vector<1x128xf32> to vector<1x32xf32>
    %197 = vector.extract_strided_slice %161 {offsets = [0, 64], sizes = [1, 32], strides = [1, 1]} : vector<1x128xf32> to vector<1x32xf32>
    %198 = arith.mulf %189, %197 : vector<1x32xf32>
    %199 = arith.addf %196, %198 : vector<1x32xf32>
    %200 = math.tanh %199 : vector<1x32xf32>
    %cst_53 = arith.constant 1.000000e+00 : f32
    %201 = vector.broadcast %cst_53 : f32 to vector<1x32xf32>
    %202 = arith.subf %201, %195 : vector<1x32xf32>
    %203 = arith.mulf %202, %200 : vector<1x32xf32>
    %204 = arith.mulf %195, %157 : vector<1x32xf32>
    %205 = arith.addf %203, %204 : vector<1x32xf32>
    %206 = vector.extract_strided_slice %12 {offsets = [4, 0], sizes = [1, 128], strides = [1, 1]} : vector<6x128xf32> to vector<1x128xf32>
    %207 = arith.truncf %205 : vector<1x32xf32> to vector<1x32xbf16>
    %cst_54 = arith.constant dense<0.000000e+00> : vector<1x128xf32>
    %208 = tpu.matmul %207, %1, %cst_54 {dimension_numbers = #tpu.dot_dimension_numbers<[1], [0], [0], [1], [0, 0, 1, 1], [], []>} : vector<1x32xbf16>, vector<32x128xbf16>, vector<1x128xf32> -> vector<1x128xf32>
    %209 = arith.addf %208, %5 : vector<1x128xf32>
    %210 = vector.extract_strided_slice %206 {offsets = [0, 0], sizes = [1, 10], strides = [1, 1]} : vector<1x128xf32> to vector<1x10xf32>
    %211 = vector.extract_strided_slice %209 {offsets = [0, 96], sizes = [1, 10], strides = [1, 1]} : vector<1x128xf32> to vector<1x10xf32>
    %212 = arith.addf %210, %211 : vector<1x10xf32>
    %cst_55 = arith.constant dense<0xFF800000> : vector<1xf32>
    %213 = vector.multi_reduction <maximumf>, %212, %cst_55 [1] : vector<1x10xf32> to vector<1xf32>
    %214 = vector.shape_cast %213 : vector<1xf32> to vector<1x1xf32>
    %215 = vector.broadcast %214 : vector<1x1xf32> to vector<1x10xf32>
    %216 = arith.subf %212, %215 : vector<1x10xf32>
    %217 = math.exp %216 : vector<1x10xf32>
    %cst_56 = arith.constant dense<0.000000e+00> : vector<1xf32>
    %218 = vector.multi_reduction <add>, %217, %cst_56 [1] : vector<1x10xf32> to vector<1xf32>
    %219 = vector.shape_cast %218 : vector<1xf32> to vector<1x1xf32>
    %220 = vector.broadcast %219 : vector<1x1xf32> to vector<1x10xf32>
    %221 = arith.divf %217, %220 : vector<1x10xf32>
    %222 = vector.extract_strided_slice %206 {offsets = [0, 10], sizes = [1, 32], strides = [1, 1]} : vector<1x128xf32> to vector<1x32xf32>
    %223 = arith.truncf %221 : vector<1x10xf32> to vector<1x10xbf16>
    %cst_57 = arith.constant dense<0.000000e+00> : vector<1x32xf32>
    %224 = tpu.matmul %223, %8, %cst_57 {dimension_numbers = #tpu.dot_dimension_numbers<[1], [0], [0], [1], [0, 0, 1, 1], [], []>} : vector<1x10xbf16>, vector<10x32xbf16>, vector<1x32xf32> -> vector<1x32xf32>
    %225 = arith.addf %222, %224 : vector<1x32xf32>
    %cst_58 = arith.constant 0.000000e+00 : f32
    %226 = vector.broadcast %cst_58 : f32 to vector<1x32xf32>
    %227 = arith.maximumf %225, %226 : vector<1x32xf32>
    %228 = arith.truncf %227 : vector<1x32xf32> to vector<1x32xbf16>
    %cst_59 = arith.constant dense<0.000000e+00> : vector<1x128xf32>
    %229 = tpu.matmul %228, %2, %cst_59 {dimension_numbers = #tpu.dot_dimension_numbers<[1], [0], [0], [1], [0, 0, 1, 1], [], []>} : vector<1x32xbf16>, vector<32x128xbf16>, vector<1x128xf32> -> vector<1x128xf32>
    %230 = arith.addf %229, %6 : vector<1x128xf32>
    %231 = arith.addf %230, %209 : vector<1x128xf32>
    %232 = vector.extract_strided_slice %231 {offsets = [0, 0], sizes = [1, 32], strides = [1, 1]} : vector<1x128xf32> to vector<1x32xf32>
    %233 = arith.negf %232 : vector<1x32xf32>
    %234 = math.exp %233 : vector<1x32xf32>
    %cst_60 = arith.constant 1.000000e+00 : f32
    %235 = vector.broadcast %cst_60 : f32 to vector<1x32xf32>
    %236 = arith.addf %235, %234 : vector<1x32xf32>
    %237 = arith.divf %235, %236 : vector<1x32xf32>
    %238 = vector.extract_strided_slice %231 {offsets = [0, 32], sizes = [1, 32], strides = [1, 1]} : vector<1x128xf32> to vector<1x32xf32>
    %239 = arith.negf %238 : vector<1x32xf32>
    %240 = math.exp %239 : vector<1x32xf32>
    %cst_61 = arith.constant 1.000000e+00 : f32
    %241 = vector.broadcast %cst_61 : f32 to vector<1x32xf32>
    %242 = arith.addf %241, %240 : vector<1x32xf32>
    %243 = arith.divf %241, %242 : vector<1x32xf32>
    %244 = vector.extract_strided_slice %230 {offsets = [0, 64], sizes = [1, 32], strides = [1, 1]} : vector<1x128xf32> to vector<1x32xf32>
    %245 = vector.extract_strided_slice %209 {offsets = [0, 64], sizes = [1, 32], strides = [1, 1]} : vector<1x128xf32> to vector<1x32xf32>
    %246 = arith.mulf %237, %245 : vector<1x32xf32>
    %247 = arith.addf %244, %246 : vector<1x32xf32>
    %248 = math.tanh %247 : vector<1x32xf32>
    %cst_62 = arith.constant 1.000000e+00 : f32
    %249 = vector.broadcast %cst_62 : f32 to vector<1x32xf32>
    %250 = arith.subf %249, %243 : vector<1x32xf32>
    %251 = arith.mulf %250, %248 : vector<1x32xf32>
    %252 = arith.mulf %243, %205 : vector<1x32xf32>
    %253 = arith.addf %251, %252 : vector<1x32xf32>
    %254 = vector.extract_strided_slice %12 {offsets = [5, 0], sizes = [1, 128], strides = [1, 1]} : vector<6x128xf32> to vector<1x128xf32>
    %255 = arith.truncf %253 : vector<1x32xf32> to vector<1x32xbf16>
    %cst_63 = arith.constant dense<0.000000e+00> : vector<1x128xf32>
    %256 = tpu.matmul %255, %1, %cst_63 {dimension_numbers = #tpu.dot_dimension_numbers<[1], [0], [0], [1], [0, 0, 1, 1], [], []>} : vector<1x32xbf16>, vector<32x128xbf16>, vector<1x128xf32> -> vector<1x128xf32>
    %257 = arith.addf %256, %5 : vector<1x128xf32>
    %258 = vector.extract_strided_slice %254 {offsets = [0, 0], sizes = [1, 10], strides = [1, 1]} : vector<1x128xf32> to vector<1x10xf32>
    %259 = vector.extract_strided_slice %257 {offsets = [0, 96], sizes = [1, 10], strides = [1, 1]} : vector<1x128xf32> to vector<1x10xf32>
    %260 = arith.addf %258, %259 : vector<1x10xf32>
    %cst_64 = arith.constant dense<0xFF800000> : vector<1xf32>
    %261 = vector.multi_reduction <maximumf>, %260, %cst_64 [1] : vector<1x10xf32> to vector<1xf32>
    %262 = vector.shape_cast %261 : vector<1xf32> to vector<1x1xf32>
    %263 = vector.broadcast %262 : vector<1x1xf32> to vector<1x10xf32>
    %264 = arith.subf %260, %263 : vector<1x10xf32>
    %265 = math.exp %264 : vector<1x10xf32>
    %cst_65 = arith.constant dense<0.000000e+00> : vector<1xf32>
    %266 = vector.multi_reduction <add>, %265, %cst_65 [1] : vector<1x10xf32> to vector<1xf32>
    %267 = vector.shape_cast %266 : vector<1xf32> to vector<1x1xf32>
    %268 = vector.broadcast %267 : vector<1x1xf32> to vector<1x10xf32>
    %269 = arith.divf %265, %268 : vector<1x10xf32>
    %270 = vector.extract_strided_slice %254 {offsets = [0, 10], sizes = [1, 32], strides = [1, 1]} : vector<1x128xf32> to vector<1x32xf32>
    %271 = arith.truncf %269 : vector<1x10xf32> to vector<1x10xbf16>
    %cst_66 = arith.constant dense<0.000000e+00> : vector<1x32xf32>
    %272 = tpu.matmul %271, %8, %cst_66 {dimension_numbers = #tpu.dot_dimension_numbers<[1], [0], [0], [1], [0, 0, 1, 1], [], []>} : vector<1x10xbf16>, vector<10x32xbf16>, vector<1x32xf32> -> vector<1x32xf32>
    %273 = arith.addf %270, %272 : vector<1x32xf32>
    %cst_67 = arith.constant 0.000000e+00 : f32
    %274 = vector.broadcast %cst_67 : f32 to vector<1x32xf32>
    %275 = arith.maximumf %273, %274 : vector<1x32xf32>
    %276 = arith.truncf %275 : vector<1x32xf32> to vector<1x32xbf16>
    %cst_68 = arith.constant dense<0.000000e+00> : vector<1x128xf32>
    %277 = tpu.matmul %276, %2, %cst_68 {dimension_numbers = #tpu.dot_dimension_numbers<[1], [0], [0], [1], [0, 0, 1, 1], [], []>} : vector<1x32xbf16>, vector<32x128xbf16>, vector<1x128xf32> -> vector<1x128xf32>
    %278 = arith.addf %277, %6 : vector<1x128xf32>
    %279 = arith.addf %278, %257 : vector<1x128xf32>
    %280 = vector.extract_strided_slice %279 {offsets = [0, 0], sizes = [1, 32], strides = [1, 1]} : vector<1x128xf32> to vector<1x32xf32>
    %281 = arith.negf %280 : vector<1x32xf32>
    %282 = math.exp %281 : vector<1x32xf32>
    %cst_69 = arith.constant 1.000000e+00 : f32
    %283 = vector.broadcast %cst_69 : f32 to vector<1x32xf32>
    %284 = arith.addf %283, %282 : vector<1x32xf32>
    %285 = arith.divf %283, %284 : vector<1x32xf32>
    %286 = vector.extract_strided_slice %279 {offsets = [0, 32], sizes = [1, 32], strides = [1, 1]} : vector<1x128xf32> to vector<1x32xf32>
    %287 = arith.negf %286 : vector<1x32xf32>
    %288 = math.exp %287 : vector<1x32xf32>
    %cst_70 = arith.constant 1.000000e+00 : f32
    %289 = vector.broadcast %cst_70 : f32 to vector<1x32xf32>
    %290 = arith.addf %289, %288 : vector<1x32xf32>
    %291 = arith.divf %289, %290 : vector<1x32xf32>
    %292 = vector.extract_strided_slice %278 {offsets = [0, 64], sizes = [1, 32], strides = [1, 1]} : vector<1x128xf32> to vector<1x32xf32>
    %293 = vector.extract_strided_slice %257 {offsets = [0, 64], sizes = [1, 32], strides = [1, 1]} : vector<1x128xf32> to vector<1x32xf32>
    %294 = arith.mulf %285, %293 : vector<1x32xf32>
    %295 = arith.addf %292, %294 : vector<1x32xf32>
    %296 = math.tanh %295 : vector<1x32xf32>
    %cst_71 = arith.constant 1.000000e+00 : f32
    %297 = vector.broadcast %cst_71 : f32 to vector<1x32xf32>
    %298 = arith.subf %297, %291 : vector<1x32xf32>
    %299 = arith.mulf %298, %296 : vector<1x32xf32>
    %300 = arith.mulf %291, %253 : vector<1x32xf32>
    %301 = arith.addf %299, %300 : vector<1x32xf32>
    %302 = tpu.concatenate %61, %109, %157, %205, %253, %301 in 0 : vector<1x32xf32>, vector<1x32xf32>, vector<1x32xf32>, vector<1x32xf32>, vector<1x32xf32>, vector<1x32xf32> -> vector<6x32xf32>
    %303 = tpu.concatenate %29, %77, %125, %173, %221, %269 in 0 : vector<1x10xf32>, vector<1x10xf32>, vector<1x10xf32>, vector<1x10xf32>, vector<1x10xf32>, vector<1x10xf32> -> vector<6x10xf32>
    %304 = arith.truncf %302 : vector<6x32xf32> to vector<6x32xbf16>
    %cst_72 = arith.constant dense<0.000000e+00> : vector<6x128xf32>
    %305 = tpu.matmul %304, %3, %cst_72 {dimension_numbers = #tpu.dot_dimension_numbers<[1], [0], [0], [1], [0, 0, 1, 1], [], []>} : vector<6x32xbf16>, vector<32x128xbf16>, vector<6x128xf32> -> vector<6x128xf32>
    %306 = vector.broadcast %7 : vector<1x128xf32> to vector<6x128xf32>
    %307 = arith.addf %305, %306 : vector<6x128xf32>
    %308 = vector.extract_strided_slice %307 {offsets = [0, 0], sizes = [6, 64], strides = [1, 1]} : vector<6x128xf32> to vector<6x64xf32>
    %cst_73 = arith.constant dense<0xFF800000> : vector<6xf32>
    %309 = vector.multi_reduction <maximumf>, %308, %cst_73 [1] : vector<6x64xf32> to vector<6xf32>
    %310 = vector.shape_cast %309 : vector<6xf32> to vector<6x1xf32>
    %311 = vector.broadcast %310 : vector<6x1xf32> to vector<6x64xf32>
    %312 = arith.subf %308, %311 : vector<6x64xf32>
    %313 = math.exp %312 : vector<6x64xf32>
    %cst_74 = arith.constant dense<0.000000e+00> : vector<6xf32>
    %314 = vector.multi_reduction <add>, %313, %cst_74 [1] : vector<6x64xf32> to vector<6xf32>
    %315 = vector.shape_cast %314 : vector<6xf32> to vector<6x1xf32>
    %316 = math.log %315 : vector<6x1xf32>
    %317 = vector.broadcast %316 : vector<6x1xf32> to vector<6x64xf32>
    %318 = arith.subf %312, %317 : vector<6x64xf32>
    %cst_75 = arith.constant 0.000000e+00 : f32
    %319 = vector.broadcast %cst_75 : f32 to vector<6x22xf32>
    %320 = tpu.concatenate %318, %302, %303, %319 in 1 : vector<6x64xf32>, vector<6x32xf32>, vector<6x10xf32>, vector<6x22xf32> -> vector<6x128xf32>
    %c0_76 = arith.constant 0 : index
    %c0_77 = arith.constant 0 : index
    %321 = vector.load %arg5[%c0_76, %c0_77] : memref<6x128xf32, #tpu.memory_space<vmem>>, vector<6x128xf32>
    tpu.vector_store %arg5[%c0_76, %c0_77], %320 {strides = array<i32>} : memref<6x128xf32, #tpu.memory_space<vmem>>, vector<6x128xf32>,
    return
  }
}

</mosaic_0001>

<llo_original>
// kernel: attn_decoder_forward_seq.1
$region0: #{attn_decoder_forward_seq.1}
  #allocation0 [shape = 'u32[]', space=smem, size = 0x4, offset = 0x4, fixed_abs, tag = 'smem constant byte address 0x4 - core index']
  #allocation1 [shape = 'u32[144,128]{1,0:T(1,128)}', space=vmem, size = 0x12000, scoped, tag = 'internal scratch']
  %s0 = inlined_call_operand.vmem [shape: bf16[6,32], index: 0, kind: input, shape index: {}]
  %s1 = inlined_call_operand.vmem [shape: f32[1,32], index: 1, kind: input, shape index: {}]
  %s2 = inlined_call_operand.vmem [shape: bf16[10,32], index: 2, kind: input, shape index: {}]
  %s3 = inlined_call_operand.vmem [shape: bf16[32,512], index: 3, kind: input, shape index: {}]
  %s4 = inlined_call_operand.vmem [shape: f32[1,512], index: 4, kind: input, shape index: {}]
  %s5 = inlined_call_operand.vmem [shape: f32[6,128], index: 5, kind: output, shape index: {}]
  %s6 = sld [smem:[#allocation0]]
  $region30: #{attn_decoder_forward_seq.1} parent=0
    _
  %s8 = ssub.s32 1, %s6
  %s9 = scalar_select 0, %s8, %s6
  // Predicated region
  $region2: #{attn_decoder_forward_seq.1} parent=0 // pred_check
    _
  $region3: #{attn_decoder_forward_seq.1} parent=0 // pred_check_branch
    %11 = sbr.rel (0) target = $region5
  $region4: #{attn_decoder_forward_seq.1} parent=0 // pred_region
    _
  $region5: #{attn_decoder_forward_seq.1} parent=0 // pred_fallthru
    _
  // Predicated region
  $region6: #{attn_decoder_forward_seq.1} parent=0 // pred_check
    _
  $region7: #{attn_decoder_forward_seq.1} parent=0 // pred_check_branch
    %13 = sbr.rel (0) target = $region9
  $region8: #{attn_decoder_forward_seq.1} parent=0 // pred_region
    _
  $region9: #{attn_decoder_forward_seq.1} parent=0 // pred_fallthru
    _
  // Predicated region
  $region10: #{attn_decoder_forward_seq.1} parent=0 // pred_check
    _
  $region11: #{attn_decoder_forward_seq.1} parent=0 // pred_check_branch
    %15 = sbr.rel (0) target = $region13
  $region12: #{attn_decoder_forward_seq.1} parent=0 // pred_region
    _
  $region13: #{attn_decoder_forward_seq.1} parent=0 // pred_fallthru
    _
  // Predicated region
  $region14: #{attn_decoder_forward_seq.1} parent=0 // pred_check
    _
  $region15: #{attn_decoder_forward_seq.1} parent=0 // pred_check_branch
    %17 = sbr.rel (0) target = $region17
  $region16: #{attn_decoder_forward_seq.1} parent=0 // pred_region
    _
  $region17: #{attn_decoder_forward_seq.1} parent=0 // pred_fallthru
    _
  // Predicated region
  $region18: #{attn_decoder_forward_seq.1} parent=0 // pred_check
    _
  $region19: #{attn_decoder_forward_seq.1} parent=0 // pred_check_branch
    %19 = sbr.rel (0) target = $region21
  $region20: #{attn_decoder_forward_seq.1} parent=0 // pred_region
    _
  $region21: #{attn_decoder_forward_seq.1} parent=0 // pred_fallthru
    _
  %v21 = vld [vmem:[%s3] sm:$0xf]
  %v22 = vld [vmem:[%s3 + $0x10] sm:$0xf]
  %v23 = vld [vmem:[%s3 + $0x20] sm:$0xf]
  %v24 = vld [vmem:[%s3 + $0x30] sm:$0xf]
  %v25 = vld [vmem:[%s3 + $0x4] sm:$0xf]
  %v26 = vld [vmem:[%s3 + $0x14] sm:$0xf]
  %v27 = vld [vmem:[%s3 + $0x24] sm:$0xf]
  %v28 = vld [vmem:[%s3 + $0x34] sm:$0xf]
  %v29 = vld [vmem:[%s3 + $0x8] sm:$0xf]
  %v30 = vld [vmem:[%s3 + $0x18] sm:$0xf]
  %v31 = vld [vmem:[%s3 + $0x28] sm:$0xf]
  %v32 = vld [vmem:[%s3 + $0x38] sm:$0xf]
  %v33 = vld [vmem:[%s3 + $0xc] sm:$0xf]
  %v34 = vld [vmem:[%s3 + $0x1c] sm:$0xf]
  %v35 = vld [vmem:[%s3 + $0x2c] sm:$0xf]
  %v36 = vld [vmem:[%s3 + $0x3c] sm:$0xf]
  %v37 = vld [vmem:[%s4] sm:$0x1]
  %v38 = vld [vmem:[%s4 + $0x1] sm:$0x1]
  %v39 = vld [vmem:[%s4 + $0x2] sm:$0x1]
  %v40 = vld [vmem:[%s4 + $0x3] sm:$0x1]
  %v41 = vld [vmem:[%s2] sm:$0xf]
  %v42 = vld [vmem:[%s2 + $0x4] sm:$0x1]
  %v43 = vld [vmem:[%s0] sm:$0x7]
  %v45 = vlaneseq
  %v46 = vshrl.u32 %v45, 7
  %v47 = vsub.s32 0, %v46
  %v48 = vrot.slane %v37, %v47
  %v54 = vunpack.c.l.b16 %v21
  %v55 = vunpack.c.l.b16 %v22
  %v56 = vunpack.c.l.b16 %v23
  %v57 = vunpack.c.l.b16 %v24
  %v58 = vpack.c.b16 %v55, %v54
  %v59 = vpack.c.b16 %v57, %v56
  %vm62 = vcmask 261120
  %v64 = vsel %vm62, %v43, 0
  %66 = vmatprep.subr.bf16.mxu0 0
  %67 = vmatpush1.bf16.msra.mxu0 0
  %68 = vmatprep.subr.bf16.mxu0 0
  %69 = vmatpush1.bf16.msra.mxu0 0
  %70 = vmatprep.subr.bf16.mxu0 0
  %71 = vmatpush1.bf16.msra.mxu0 0
  %72 = vmatprep.subr.bf16.mxu0 0
  %73 = vmatpush1.bf16.msra.mxu0 0
  %74 = vmatprep.subr.bf16.mxu0 0
  %75 = vmatpush1.bf16.msra.mxu0 0
  %76 = vmatprep.subr.bf16.mxu0 0
  %77 = vmatpush1.bf16.msra.mxu0 0
  %78 = vmatprep.subr.bf16.mxu0 0
  %79 = vmatpush1.bf16.msra.mxu0 %v59
  %80 = vmatprep.subr.bf16.mxu0 0
  %81 = vmatpush1.bf16.msra.mxu0 %v58
  %82 = vmatprep.subr.bf16.mxu0 0
  %83 = vmatpush2.bf16.msra.mxu0 0
  %84 = vmatprep.subr.bf16.mxu0 0
  %85 = vmatpush2.bf16.msra.mxu0 0
  %86 = vmatprep.subr.bf16.mxu0 0
  %87 = vmatpush2.bf16.msra.mxu0 0
  %88 = vmatprep.subr.bf16.mxu0 0
  %89 = vmatpush2.bf16.msra.mxu0 0
  %90 = vmatprep.subr.bf16.mxu0 0
  %91 = vmatpush2.bf16.msra.mxu0 0
  %92 = vmatprep.subr.bf16.mxu0 0
  %93 = vmatpush2.bf16.msra.mxu0 0
  %94 = vmatprep.subr.bf16.mxu0 0
  %95 = vmatpush2.bf16.msra.mxu0 0
  %96 = vmatprep.subr.bf16.mxu0 0
  %97 = vmatpush2.bf16.msra.mxu0 0
  %98 = vmatprep.mubr.bf16.mxu0 0
  %99 = vmatmul.mubr.bf16.gmra.mxu0 %v64
  %v100 = vpop.f32.mrf.mxu0
  %v101 = vadd.f32 %v48, %v100
  %v102 = vpop.f32.mrf.mxu0
  %v103 = vpop.f32.mrf.mxu0
  %v104 = vpop.f32.mrf.mxu0
  %105 = vdwg.mxu0
  %v106 = vld [vmem:[%s1] sm:$0x1]
  %v107 = vpack.c.bf16 %v106, %v106
  %v112 = vunpack.c.l.b16 %v25
  %v113 = vunpack.c.l.b16 %v26
  %v114 = vunpack.c.l.b16 %v27
  %v115 = vunpack.c.l.b16 %v28
  %v116 = vpack.c.b16 %v113, %v112
  %v117 = vpack.c.b16 %v115, %v114
  %v121 = vsel %vm62, %v107, 0
  %123 = vmatprep.subr.bf16.mxu0 0
  %124 = vmatpush1.bf16.msra.mxu0 0
  %125 = vmatprep.subr.bf16.mxu0 0
  %126 = vmatpush1.bf16.msra.mxu0 0
  %127 = vmatprep.subr.bf16.mxu0 0
  %128 = vmatpush1.bf16.msra.mxu0 0
  %129 = vmatprep.subr.bf16.mxu0 0
  %130 = vmatpush1.bf16.msra.mxu0 0
  %131 = vmatprep.subr.bf16.mxu0 0
  %132 = vmatpush1.bf16.msra.mxu0 0
  %133 = vmatprep.subr.bf16.mxu0 0
  %134 = vmatpush1.bf16.msra.mxu0 0
  %135 = vmatprep.subr.bf16.mxu0 0
  %136 = vmatpush1.bf16.msra.mxu0 %v117
  %137 = vmatprep.subr.bf16.mxu0 0
  %138 = vmatpush1.bf16.msra.mxu0 %v116
  %139 = vmatprep.subr.bf16.mxu0 0
  %140 = vmatpush2.bf16.msra.mxu0 0
  %141 = vmatprep.subr.bf16.mxu0 0
  %142 = vmatpush2.bf16.msra.mxu0 0
  %143 = vmatprep.subr.bf16.mxu0 0
  %144 = vmatpush2.bf16.msra.mxu0 0
  %145 = vmatprep.subr.bf16.mxu0 0
  %146 = vmatpush2.bf16.msra.mxu0 0
  %147 = vmatprep.subr.bf16.mxu0 0
  %148 = vmatpush2.bf16.msra.mxu0 0
  %149 = vmatprep.subr.bf16.mxu0 0
  %150 = vmatpush2.bf16.msra.mxu0 0
  %151 = vmatprep.subr.bf16.mxu0 0
  %152 = vmatpush2.bf16.msra.mxu0 0
  %153 = vmatprep.subr.bf16.mxu0 0
  %154 = vmatpush2.bf16.msra.mxu0 0
  %155 = vmatprep.mubr.bf16.mxu0 0
  %156 = vmatmul.mubr.bf16.gmra.mxu0 %v121
  %v157 = vpop.f32.mrf.mxu0
  %v158 = vadd.f32 %v38, %v157
  %v159 = vpop.f32.mrf.mxu0
  %v160 = vpop.f32.mrf.mxu0
  %v161 = vpop.f32.mrf.mxu0
  %162 = vdwg.mxu0
  %164 = vrot.lane.b32.xlu0 %v158, 32
  %v165 = vpop.permute.xlu0 %164
  %v167 = vadd.f32 %v101, %v165
  %vm168 = vcmask 73728
  %v169 = vsel %vm168, %v167, -inf
  %170 = vmax.xlane.f32.xlu0 %v169
  %v171 = vpop.xlane.xlu0 %170
  %v172 = vsub.f32 %v167, %v171
  %v173 = vmul.f32 %v172, 1.442695
  %v174 = vpow.pop %v173
  %v175 = vsel %vm168, %v174, 0.0
  %176 = vadd.xlane.f32.xlu0 %v175
  %v177 = vpop.xlane.xlu0 %176
  %v178 = vrcp.pop %v177
  %v179 = vmul.f32 %v174, %v178
  %v180 = vpack.c.bf16 %v179, %v179
  %v183 = vunpack.c.l.b16 %v41
  %v184 = vunpack.c.l.b16 %v42
  %v185 = vpack.c.b16 %v184, %v183
  %vm186 = vcmask 80896
  %v188 = vsel %vm186, %v180, 0
  %vm190 = vcmask 1044480
  %v192 = vsel %vm190, %v185, 0
  %194 = vmatprep.subr.bf16.mxu0 0
  %195 = vmatpush1.bf16.msra.mxu0 0
  %196 = vmatprep.subr.bf16.mxu0 0
  %197 = vmatpush1.bf16.msra.mxu0 0
  %198 = vmatprep.subr.bf16.mxu0 0
  %199 = vmatpush1.bf16.msra.mxu0 0
  %200 = vmatprep.subr.bf16.mxu0 0
  %201 = vmatpush1.bf16.msra.mxu0 0
  %202 = vmatprep.subr.bf16.mxu0 0
  %203 = vmatpush1.bf16.msra.mxu0 0
  %204 = vmatprep.subr.bf16.mxu0 0
  %205 = vmatpush1.bf16.msra.mxu0 0
  %206 = vmatprep.subr.bf16.mxu0 0
  %207 = vmatpush1.bf16.msra.mxu0 0
  %208 = vmatprep.subr.bf16.mxu0 0
  %209 = vmatpush1.bf16.msra.mxu0 %v192
  %210 = vmatprep.subr.bf16.mxu0 0
  %211 = vmatpush2.bf16.msra.mxu0 0
  %212 = vmatprep.subr.bf16.mxu0 0
  %213 = vmatpush2.bf16.msra.mxu0 0
  %214 = vmatprep.subr.bf16.mxu0 0
  %215 = vmatpush2.bf16.msra.mxu0 0
  %216 = vmatprep.subr.bf16.mxu0 0
  %217 = vmatpush2.bf16.msra.mxu0 0
  %218 = vmatprep.subr.bf16.mxu0 0
  %219 = vmatpush2.bf16.msra.mxu0 0
  %220 = vmatprep.subr.bf16.mxu0 0
  %221 = vmatpush2.bf16.msra.mxu0 0
  %222 = vmatprep.subr.bf16.mxu0 0
  %223 = vmatpush2.bf16.msra.mxu0 0
  %224 = vmatprep.subr.bf16.mxu0 0
  %225 = vmatpush2.bf16.msra.mxu0 0
  %226 = vmatprep.mubr.bf16.mxu0 0
  %227 = vmatmul.mubr.bf16.gmra.mxu0 %v188
  %v228 = vpop.f32.mrf.mxu0
  %v229 = vadd.f32 0.0, %v228
  %v230 = vpop.f32.mrf.mxu0
  %v231 = vpop.f32.mrf.mxu0
  %v232 = vpop.f32.mrf.mxu0
  %233 = vdwg.mxu0
  %235 = vrot.lane.b32.xlu0 %v229, 10
  %v236 = vpop.permute.xlu0 %235
  %v238 = vadd.f32 %v101, %v236
  %v239 = vmax.f32 %v238, 0.0
  %v240 = vpack.c.bf16 %v239, %v239
  %242 = vrot.lane.b32.xlu0 %v240, 118
  %v243 = vpop.permute.xlu0 %242
  %v248 = vunpack.c.l.b16 %v29
  %v249 = vunpack.c.l.b16 %v30
  %v250 = vunpack.c.l.b16 %v31
  %v251 = vunpack.c.l.b16 %v32
  %v252 = vpack.c.b16 %v249, %v248
  %v253 = vpack.c.b16 %v251, %v250
  %v257 = vsel %vm62, %v243, 0
  %259 = vmatprep.subr.bf16.mxu0 0
  %260 = vmatpush1.bf16.msra.mxu0 0
  %261 = vmatprep.subr.bf16.mxu0 0
  %262 = vmatpush1.bf16.msra.mxu0 0
  %263 = vmatprep.subr.bf16.mxu0 0
  %264 = vmatpush1.bf16.msra.mxu0 0
  %265 = vmatprep.subr.bf16.mxu0 0
  %266 = vmatpush1.bf16.msra.mxu0 0
  %267 = vmatprep.subr.bf16.mxu0 0
  %268 = vmatpush1.bf16.msra.mxu0 0
  %269 = vmatprep.subr.bf16.mxu0 0
  %270 = vmatpush1.bf16.msra.mxu0 0
  %271 = vmatprep.subr.bf16.mxu0 0
  %272 = vmatpush1.bf16.msra.mxu0 %v253
  %273 = vmatprep.subr.bf16.mxu0 0
  %274 = vmatpush1.bf16.msra.mxu0 %v252
  %275 = vmatprep.subr.bf16.mxu0 0
  %276 = vmatpush2.bf16.msra.mxu0 0
  %277 = vmatprep.subr.bf16.mxu0 0
  %278 = vmatpush2.bf16.msra.mxu0 0
  %279 = vmatprep.subr.bf16.mxu0 0
  %280 = vmatpush2.bf16.msra.mxu0 0
  %281 = vmatprep.subr.bf16.mxu0 0
  %282 = vmatpush2.bf16.msra.mxu0 0
  %283 = vmatprep.subr.bf16.mxu0 0
  %284 = vmatpush2.bf16.msra.mxu0 0
  %285 = vmatprep.subr.bf16.mxu0 0
  %286 = vmatpush2.bf16.msra.mxu0 0
  %287 = vmatprep.subr.bf16.mxu0 0
  %288 = vmatpush2.bf16.msra.mxu0 0
  %289 = vmatprep.subr.bf16.mxu0 0
  %290 = vmatpush2.bf16.msra.mxu0 0
  %291 = vmatprep.mubr.bf16.mxu0 0
  %292 = vmatmul.mubr.bf16.gmra.mxu0 %v257
  %v293 = vpop.f32.mrf.mxu0
  %v294 = vadd.f32 %v39, %v293
  %v295 = vpop.f32.mrf.mxu0
  %v296 = vpop.f32.mrf.mxu0
  %v297 = vpop.f32.mrf.mxu0
  %298 = vdwg.mxu0
  %v299 = vadd.f32 %v294, %v158
  %v300 = vxor.u32 %v299, 2147483648
  %v301 = vmul.f32 %v300, 1.442695
  %v302 = vpow.pop %v301
  %v303 = vadd.f32 %v302, 1.0
  %v304 = vrcp.pop %v303
  %v305 = vmul.f32 1.0, %v304
  %306 = vrot.lane.b32.xlu0 %v158, 64
  %v307 = vpop.permute.xlu0 %306
  %v309 = vmul.f32 %v305, %v307
  %311 = vrot.lane.b32.xlu0 %v309, 64
  %v312 = vpop.permute.xlu0 %311
  %v314 = vadd.f32 %v294, %v312
  %v315 = vtanh.pop %v314
  %v316 = vsub.f32 1.0, %v305
  %318 = vrot.lane.b32.xlu0 %v315, 96
  %v319 = vpop.permute.xlu0 %318
  %v321 = vmul.f32 %v316, %v319
  %v323 = vlaneseq
  %v324 = vshrl.u32 %v323, 7
  %v325 = vsub.s32 0, %v324
  %v326 = vrot.slane %v106, %v325
  %327 = vrot.lane.b32.xlu0 %v326, 32
  %v328 = vpop.permute.xlu0 %327
  %v330 = vmul.f32 %v305, %v328
  %v331 = vadd.f32 %v321, %v330
  %v332 = vpack.c.bf16 %v331, %v331
  %334 = vrot.lane.b32.xlu0 %v332, 96
  %v335 = vpop.permute.xlu0 %334
  %v337 = vsel %vm62, %v335, 0
  %339 = vmatprep.subr.bf16.mxu0 0
  %340 = vmatpush1.bf16.msra.mxu0 0
  %341 = vmatprep.subr.bf16.mxu0 0
  %342 = vmatpush1.bf16.msra.mxu0 0
  %343 = vmatprep.subr.bf16.mxu0 0
  %344 = vmatpush1.bf16.msra.mxu0 0
  %345 = vmatprep.subr.bf16.mxu0 0
  %346 = vmatpush1.bf16.msra.mxu0 0
  %347 = vmatprep.subr.bf16.mxu0 0
  %348 = vmatpush1.bf16.msra.mxu0 0
  %349 = vmatprep.subr.bf16.mxu0 0
  %350 = vmatpush1.bf16.msra.mxu0 0
  %351 = vmatprep.subr.bf16.mxu0 0
  %352 = vmatpush1.bf16.msra.mxu0 %v117
  %353 = vmatprep.subr.bf16.mxu0 0
  %354 = vmatpush1.bf16.msra.mxu0 %v116
  %355 = vmatprep.subr.bf16.mxu0 0
  %356 = vmatpush2.bf16.msra.mxu0 0
  %357 = vmatprep.subr.bf16.mxu0 0
  %358 = vmatpush2.bf16.msra.mxu0 0
  %359 = vmatprep.subr.bf16.mxu0 0
  %360 = vmatpush2.bf16.msra.mxu0 0
  %361 = vmatprep.subr.bf16.mxu0 0
  %362 = vmatpush2.bf16.msra.mxu0 0
  %363 = vmatprep.subr.bf16.mxu0 0
  %364 = vmatpush2.bf16.msra.mxu0 0
  %365 = vmatprep.subr.bf16.mxu0 0
  %366 = vmatpush2.bf16.msra.mxu0 0
  %367 = vmatprep.subr.bf16.mxu0 0
  %368 = vmatpush2.bf16.msra.mxu0 0
  %369 = vmatprep.subr.bf16.mxu0 0
  %370 = vmatpush2.bf16.msra.mxu0 0
  %371 = vmatprep.mubr.bf16.mxu0 0
  %372 = vmatmul.mubr.bf16.gmra.mxu0 %v337
  %v373 = vpop.f32.mrf.mxu0
  %v374 = vadd.f32 %v38, %v373
  %v375 = vpop.f32.mrf.mxu0
  %v376 = vpop.f32.mrf.mxu0
  %v377 = vpop.f32.mrf.mxu0
  %378 = vdwg.mxu0
  %v380 = vrot.slane %v374, 7
  %381 = vrot.lane.b32.xlu0 %v380, 32
  %v382 = vpop.permute.xlu0 %381
  %v384 = vadd.f32 %v101, %v382
  %vm385 = vcmask 74753
  %v386 = vsel %vm385, %v384, -inf
  %387 = vmax.xlane.f32.xlu0 %v386
  %v388 = vpop.xlane.xlu0 %387
  %v389 = vsub.f32 %v384, %v388
  %v390 = vmul.f32 %v389, 1.442695
  %v391 = vpow.pop %v390
  %v392 = vsel %vm385, %v391, 0.0
  %393 = vadd.xlane.f32.xlu0 %v392
  %v394 = vpop.xlane.xlu0 %393
  %v395 = vrcp.pop %v394
  %v396 = vmul.f32 %v391, %v395
  %v397 = vpack.c.bf16 %v396, %v396
  %v399 = vshrl.u32 %v397, 16
  %v402 = vsel %vm186, %v399, 0
  %404 = vmatprep.subr.bf16.mxu0 0
  %405 = vmatpush1.bf16.msra.mxu0 0
  %406 = vmatprep.subr.bf16.mxu0 0
  %407 = vmatpush1.bf16.msra.mxu0 0
  %408 = vmatprep.subr.bf16.mxu0 0
  %409 = vmatpush1.bf16.msra.mxu0 0
  %410 = vmatprep.subr.bf16.mxu0 0
  %411 = vmatpush1.bf16.msra.mxu0 0
  %412 = vmatprep.subr.bf16.mxu0 0
  %413 = vmatpush1.bf16.msra.mxu0 0
  %414 = vmatprep.subr.bf16.mxu0 0
  %415 = vmatpush1.bf16.msra.mxu0 0
  %416 = vmatprep.subr.bf16.mxu0 0
  %417 = vmatpush1.bf16.msra.mxu0 0
  %418 = vmatprep.subr.bf16.mxu0 0
  %419 = vmatpush1.bf16.msra.mxu0 %v192
  %420 = vmatprep.subr.bf16.mxu0 0
  %421 = vmatpush2.bf16.msra.mxu0 0
  %422 = vmatprep.subr.bf16.mxu0 0
  %423 = vmatpush2.bf16.msra.mxu0 0
  %424 = vmatprep.subr.bf16.mxu0 0
  %425 = vmatpush2.bf16.msra.mxu0 0
  %426 = vmatprep.subr.bf16.mxu0 0
  %427 = vmatpush2.bf16.msra.mxu0 0
  %428 = vmatprep.subr.bf16.mxu0 0
  %429 = vmatpush2.bf16.msra.mxu0 0
  %430 = vmatprep.subr.bf16.mxu0 0
  %431 = vmatpush2.bf16.msra.mxu0 0
  %432 = vmatprep.subr.bf16.mxu0 0
  %433 = vmatpush2.bf16.msra.mxu0 0
  %434 = vmatprep.subr.bf16.mxu0 0
  %435 = vmatpush2.bf16.msra.mxu0 0
  %436 = vmatprep.mubr.bf16.mxu0 0
  %437 = vmatmul.mubr.bf16.gmra.mxu0 %v402
  %v438 = vpop.f32.mrf.mxu0
  %v439 = vadd.f32 0.0, %v438
  %v440 = vpop.f32.mrf.mxu0
  %v441 = vpop.f32.mrf.mxu0
  %v442 = vpop.f32.mrf.mxu0
  %443 = vdwg.mxu0
  %v445 = vrot.slane %v439, 7
  %446 = vrot.lane.b32.xlu0 %v445, 10
  %v447 = vpop.permute.xlu0 %446
  %v449 = vadd.f32 %v101, %v447
  %v450 = vmax.f32 %v449, 0.0
  %v451 = vpack.c.bf16 %v450, %v450
  %v453 = vshrl.u32 %v451, 16
  %455 = vrot.lane.b32.xlu0 %v453, 118
  %v456 = vpop.permute.xlu0 %455
  %v458 = vsel %vm62, %v456, 0
  %460 = vmatprep.subr.bf16.mxu0 0
  %461 = vmatpush1.bf16.msra.mxu0 0
  %462 = vmatprep.subr.bf16.mxu0 0
  %463 = vmatpush1.bf16.msra.mxu0 0
  %464 = vmatprep.subr.bf16.mxu0 0
  %465 = vmatpush1.bf16.msra.mxu0 0
  %466 = vmatprep.subr.bf16.mxu0 0
  %467 = vmatpush1.bf16.msra.mxu0 0
  %468 = vmatprep.subr.bf16.mxu0 0
  %469 = vmatpush1.bf16.msra.mxu0 0
  %470 = vmatprep.subr.bf16.mxu0 0
  %471 = vmatpush1.bf16.msra.mxu0 0
  %472 = vmatprep.subr.bf16.mxu0 0
  %473 = vmatpush1.bf16.msra.mxu0 %v253
  %474 = vmatprep.subr.bf16.mxu0 0
  %475 = vmatpush1.bf16.msra.mxu0 %v252
  %476 = vmatprep.subr.bf16.mxu0 0
  %477 = vmatpush2.bf16.msra.mxu0 0
  %478 = vmatprep.subr.bf16.mxu0 0
  %479 = vmatpush2.bf16.msra.mxu0 0
  %480 = vmatprep.subr.bf16.mxu0 0
  %481 = vmatpush2.bf16.msra.mxu0 0
  %482 = vmatprep.subr.bf16.mxu0 0
  %483 = vmatpush2.bf16.msra.mxu0 0
  %484 = vmatprep.subr.bf16.mxu0 0
  %485 = vmatpush2.bf16.msra.mxu0 0
  %486 = vmatprep.subr.bf16.mxu0 0
  %487 = vmatpush2.bf16.msra.mxu0 0
  %488 = vmatprep.subr.bf16.mxu0 0
  %489 = vmatpush2.bf16.msra.mxu0 0
  %490 = vmatprep.subr.bf16.mxu0 0
  %491 = vmatpush2.bf16.msra.mxu0 0
  %492 = vmatprep.mubr.bf16.mxu0 0
  %493 = vmatmul.mubr.bf16.gmra.mxu0 %v458
  %v494 = vpop.f32.mrf.mxu0
  %v495 = vadd.f32 %v39, %v494
  %v496 = vpop.f32.mrf.mxu0
  %v497 = vpop.f32.mrf.mxu0
  %v498 = vpop.f32.mrf.mxu0
  %499 = vdwg.mxu0
  %v500 = vadd.f32 %v495, %v374
  %v501 = vxor.u32 %v500, 2147483648
  %v502 = vmul.f32 %v501, 1.442695
  %v503 = vpow.pop %v502
  %v504 = vadd.f32 %v503, 1.0
  %v505 = vrcp.pop %v504
  %v506 = vmul.f32 1.0, %v505
  %507 = vrot.lane.b32.xlu0 %v374, 64
  %v508 = vpop.permute.xlu0 %507
  %v510 = vmul.f32 %v506, %v508
  %512 = vrot.lane.b32.xlu0 %v510, 64
  %v513 = vpop.permute.xlu0 %512
  %v515 = vadd.f32 %v495, %v513
  %v516 = vtanh.pop %v515
  %v517 = vsub.f32 1.0, %v506
  %519 = vrot.lane.b32.xlu0 %v516, 96
  %v520 = vpop.permute.xlu0 %519
  %v522 = vmul.f32 %v517, %v520
  %v523 = vmul.f32 %v506, %v331
  %v524 = vadd.f32 %v522, %v523
  %v525 = vpack.c.bf16 %v524, %v524
  %527 = vrot.lane.b32.xlu0 %v525, 96
  %v528 = vpop.permute.xlu0 %527
  %v530 = vsel %vm62, %v528, 0
  %532 = vmatprep.subr.bf16.mxu0 0
  %533 = vmatpush1.bf16.msra.mxu0 0
  %534 = vmatprep.subr.bf16.mxu0 0
  %535 = vmatpush1.bf16.msra.mxu0 0
  %536 = vmatprep.subr.bf16.mxu0 0
  %537 = vmatpush1.bf16.msra.mxu0 0
  %538 = vmatprep.subr.bf16.mxu0 0
  %539 = vmatpush1.bf16.msra.mxu0 0
  %540 = vmatprep.subr.bf16.mxu0 0
  %541 = vmatpush1.bf16.msra.mxu0 0
  %542 = vmatprep.subr.bf16.mxu0 0
  %543 = vmatpush1.bf16.msra.mxu0 0
  %544 = vmatprep.subr.bf16.mxu0 0
  %545 = vmatpush1.bf16.msra.mxu0 %v117
  %546 = vmatprep.subr.bf16.mxu0 0
  %547 = vmatpush1.bf16.msra.mxu0 %v116
  %548 = vmatprep.subr.bf16.mxu0 0
  %549 = vmatpush2.bf16.msra.mxu0 0
  %550 = vmatprep.subr.bf16.mxu0 0
  %551 = vmatpush2.bf16.msra.mxu0 0
  %552 = vmatprep.subr.bf16.mxu0 0
  %553 = vmatpush2.bf16.msra.mxu0 0
  %554 = vmatprep.subr.bf16.mxu0 0
  %555 = vmatpush2.bf16.msra.mxu0 0
  %556 = vmatprep.subr.bf16.mxu0 0
  %557 = vmatpush2.bf16.msra.mxu0 0
  %558 = vmatprep.subr.bf16.mxu0 0
  %559 = vmatpush2.bf16.msra.mxu0 0
  %560 = vmatprep.subr.bf16.mxu0 0
  %561 = vmatpush2.bf16.msra.mxu0 0
  %562 = vmatprep.subr.bf16.mxu0 0
  %563 = vmatpush2.bf16.msra.mxu0 0
  %564 = vmatprep.mubr.bf16.mxu0 0
  %565 = vmatmul.mubr.bf16.gmra.mxu0 %v530
  %v566 = vpop.f32.mrf.mxu0
  %v567 = vadd.f32 %v38, %v566
  %v568 = vpop.f32.mrf.mxu0
  %v569 = vpop.f32.mrf.mxu0
  %v570 = vpop.f32.mrf.mxu0
  %571 = vdwg.mxu0
  %v573 = vrot.slane %v567, 6
  %574 = vrot.lane.b32.xlu0 %v573, 32
  %v575 = vpop.permute.xlu0 %574
  %v577 = vadd.f32 %v101, %v575
  %vm578 = vcmask 75778
  %v579 = vsel %vm578, %v577, -inf
  %580 = vmax.xlane.f32.xlu0 %v579
  %v581 = vpop.xlane.xlu0 %580
  %v582 = vsub.f32 %v577, %v581
  %v583 = vmul.f32 %v582, 1.442695
  %v584 = vpow.pop %v583
  %v585 = vsel %vm578, %v584, 0.0
  %586 = vadd.xlane.f32.xlu0 %v585
  %v587 = vpop.xlane.xlu0 %586
  %v588 = vrcp.pop %v587
  %v589 = vmul.f32 %v584, %v588
  %v590 = vpack.c.bf16 %v589, %v589
  %v592 = vrot.slane %v590, 1
  %v594 = vsel %vm186, %v592, 0
  %596 = vmatprep.subr.bf16.mxu0 0
  %597 = vmatpush1.bf16.msra.mxu0 0
  %598 = vmatprep.subr.bf16.mxu0 0
  %599 = vmatpush1.bf16.msra.mxu0 0
  %600 = vmatprep.subr.bf16.mxu0 0
  %601 = vmatpush1.bf16.msra.mxu0 0
  %602 = vmatprep.subr.bf16.mxu0 0
  %603 = vmatpush1.bf16.msra.mxu0 0
  %604 = vmatprep.subr.bf16.mxu0 0
  %605 = vmatpush1.bf16.msra.mxu0 0
  %606 = vmatprep.subr.bf16.mxu0 0
  %607 = vmatpush1.bf16.msra.mxu0 0
  %608 = vmatprep.subr.bf16.mxu0 0
  %609 = vmatpush1.bf16.msra.mxu0 0
  %610 = vmatprep.subr.bf16.mxu0 0
  %611 = vmatpush1.bf16.msra.mxu0 %v192
  %612 = vmatprep.subr.bf16.mxu0 0
  %613 = vmatpush2.bf16.msra.mxu0 0
  %614 = vmatprep.subr.bf16.mxu0 0
  %615 = vmatpush2.bf16.msra.mxu0 0
  %616 = vmatprep.subr.bf16.mxu0 0
  %617 = vmatpush2.bf16.msra.mxu0 0
  %618 = vmatprep.subr.bf16.mxu0 0
  %619 = vmatpush2.bf16.msra.mxu0 0
  %620 = vmatprep.subr.bf16.mxu0 0
  %621 = vmatpush2.bf16.msra.mxu0 0
  %622 = vmatprep.subr.bf16.mxu0 0
  %623 = vmatpush2.bf16.msra.mxu0 0
  %624 = vmatprep.subr.bf16.mxu0 0
  %625 = vmatpush2.bf16.msra.mxu0 0
  %626 = vmatprep.subr.bf16.mxu0 0
  %627 = vmatpush2.bf16.msra.mxu0 0
  %628 = vmatprep.mubr.bf16.mxu0 0
  %629 = vmatmul.mubr.bf16.gmra.mxu0 %v594
  %v630 = vpop.f32.mrf.mxu0
  %v631 = vadd.f32 0.0, %v630
  %v632 = vpop.f32.mrf.mxu0
  %v633 = vpop.f32.mrf.mxu0
  %v634 = vpop.f32.mrf.mxu0
  %635 = vdwg.mxu0
  %v637 = vrot.slane %v631, 6
  %638 = vrot.lane.b32.xlu0 %v637, 10
  %v639 = vpop.permute.xlu0 %638
  %v641 = vadd.f32 %v101, %v639
  %v642 = vmax.f32 %v641, 0.0
  %v643 = vpack.c.bf16 %v642, %v642
  %v645 = vrot.slane %v643, 1
  %646 = vrot.lane.b32.xlu0 %v645, 118
  %v647 = vpop.permute.xlu0 %646
  %v649 = vsel %vm62, %v647, 0
  %651 = vmatprep.subr.bf16.mxu0 0
  %652 = vmatpush1.bf16.msra.mxu0 0
  %653 = vmatprep.subr.bf16.mxu0 0
  %654 = vmatpush1.bf16.msra.mxu0 0
  %655 = vmatprep.subr.bf16.mxu0 0
  %656 = vmatpush1.bf16.msra.mxu0 0
  %657 = vmatprep.subr.bf16.mxu0 0
  %658 = vmatpush1.bf16.msra.mxu0 0
  %659 = vmatprep.subr.bf16.mxu0 0
  %660 = vmatpush1.bf16.msra.mxu0 0
  %661 = vmatprep.subr.bf16.mxu0 0
  %662 = vmatpush1.bf16.msra.mxu0 0
  %663 = vmatprep.subr.bf16.mxu0 0
  %664 = vmatpush1.bf16.msra.mxu0 %v253
  %665 = vmatprep.subr.bf16.mxu0 0
  %666 = vmatpush1.bf16.msra.mxu0 %v252
  %667 = vmatprep.subr.bf16.mxu0 0
  %668 = vmatpush2.bf16.msra.mxu0 0
  %669 = vmatprep.subr.bf16.mxu0 0
  %670 = vmatpush2.bf16.msra.mxu0 0
  %671 = vmatprep.subr.bf16.mxu0 0
  %672 = vmatpush2.bf16.msra.mxu0 0
  %673 = vmatprep.subr.bf16.mxu0 0
  %674 = vmatpush2.bf16.msra.mxu0 0
  %675 = vmatprep.subr.bf16.mxu0 0
  %676 = vmatpush2.bf16.msra.mxu0 0
  %677 = vmatprep.subr.bf16.mxu0 0
  %678 = vmatpush2.bf16.msra.mxu0 0
  %679 = vmatprep.subr.bf16.mxu0 0
  %680 = vmatpush2.bf16.msra.mxu0 0
  %681 = vmatprep.subr.bf16.mxu0 0
  %682 = vmatpush2.bf16.msra.mxu0 0
  %683 = vmatprep.mubr.bf16.mxu0 0
  %684 = vmatmul.mubr.bf16.gmra.mxu0 %v649
  %v685 = vpop.f32.mrf.mxu0
  %v686 = vadd.f32 %v39, %v685
  %v687 = vpop.f32.mrf.mxu0
  %v688 = vpop.f32.mrf.mxu0
  %v689 = vpop.f32.mrf.mxu0
  %690 = vdwg.mxu0
  %v691 = vadd.f32 %v686, %v567
  %v692 = vxor.u32 %v691, 2147483648
  %v693 = vmul.f32 %v692, 1.442695
  %v694 = vpow.pop %v693
  %v695 = vadd.f32 %v694, 1.0
  %v696 = vrcp.pop %v695
  %v697 = vmul.f32 1.0, %v696
  %698 = vrot.lane.b32.xlu0 %v567, 64
  %v699 = vpop.permute.xlu0 %698
  %v701 = vmul.f32 %v697, %v699
  %703 = vrot.lane.b32.xlu0 %v701, 64
  %v704 = vpop.permute.xlu0 %703
  %v706 = vadd.f32 %v686, %v704
  %v707 = vtanh.pop %v706
  %v708 = vsub.f32 1.0, %v697
  %710 = vrot.lane.b32.xlu0 %v707, 96
  %v711 = vpop.permute.xlu0 %710
  %v713 = vmul.f32 %v708, %v711
  %v714 = vmul.f32 %v697, %v524
  %v715 = vadd.f32 %v713, %v714
  %v716 = vpack.c.bf16 %v715, %v715
  %718 = vrot.lane.b32.xlu0 %v716, 96
  %v719 = vpop.permute.xlu0 %718
  %v721 = vsel %vm62, %v719, 0
  %723 = vmatprep.subr.bf16.mxu0 0
  %724 = vmatpush1.bf16.msra.mxu0 0
  %725 = vmatprep.subr.bf16.mxu0 0
  %726 = vmatpush1.bf16.msra.mxu0 0
  %727 = vmatprep.subr.bf16.mxu0 0
  %728 = vmatpush1.bf16.msra.mxu0 0
  %729 = vmatprep.subr.bf16.mxu0 0
  %730 = vmatpush1.bf16.msra.mxu0 0
  %731 = vmatprep.subr.bf16.mxu0 0
  %732 = vmatpush1.bf16.msra.mxu0 0
  %733 = vmatprep.subr.bf16.mxu0 0
  %734 = vmatpush1.bf16.msra.mxu0 0
  %735 = vmatprep.subr.bf16.mxu0 0
  %736 = vmatpush1.bf16.msra.mxu0 %v117
  %737 = vmatprep.subr.bf16.mxu0 0
  %738 = vmatpush1.bf16.msra.mxu0 %v116
  %739 = vmatprep.subr.bf16.mxu0 0
  %740 = vmatpush2.bf16.msra.mxu0 0
  %741 = vmatprep.subr.bf16.mxu0 0
  %742 = vmatpush2.bf16.msra.mxu0 0
  %743 = vmatprep.subr.bf16.mxu0 0
  %744 = vmatpush2.bf16.msra.mxu0 0
  %745 = vmatprep.subr.bf16.mxu0 0
  %746 = vmatpush2.bf16.msra.mxu0 0
  %747 = vmatprep.subr.bf16.mxu0 0
  %748 = vmatpush2.bf16.msra.mxu0 0
  %749 = vmatprep.subr.bf16.mxu0 0
  %750 = vmatpush2.bf16.msra.mxu0 0
  %751 = vmatprep.subr.bf16.mxu0 0
  %752 = vmatpush2.bf16.msra.mxu0 0
  %753 = vmatprep.subr.bf16.mxu0 0
  %754 = vmatpush2.bf16.msra.mxu0 0
  %755 = vmatprep.mubr.bf16.mxu0 0
  %756 = vmatmul.mubr.bf16.gmra.mxu0 %v721
  %v757 = vpop.f32.mrf.mxu0
  %v758 = vadd.f32 %v38, %v757
  %v759 = vpop.f32.mrf.mxu0
  %v760 = vpop.f32.mrf.mxu0
  %v761 = vpop.f32.mrf.mxu0
  %762 = vdwg.mxu0
  %v764 = vrot.slane %v758, 5
  %765 = vrot.lane.b32.xlu0 %v764, 32
  %v766 = vpop.permute.xlu0 %765
  %v768 = vadd.f32 %v101, %v766
  %vm769 = vcmask 76803
  %v770 = vsel %vm769, %v768, -inf
  %771 = vmax.xlane.f32.xlu0 %v770
  %v772 = vpop.xlane.xlu0 %771
  %v773 = vsub.f32 %v768, %v772
  %v774 = vmul.f32 %v773, 1.442695
  %v775 = vpow.pop %v774
  %v776 = vsel %vm769, %v775, 0.0
  %777 = vadd.xlane.f32.xlu0 %v776
  %v778 = vpop.xlane.xlu0 %777
  %v779 = vrcp.pop %v778
  %v780 = vmul.f32 %v775, %v779
  %v781 = vpack.c.bf16 %v780, %v780
  %v783 = vshrl.u32 %v781, 16
  %v785 = vrot.slane %v783, 1
  %v787 = vsel %vm186, %v785, 0
  %789 = vmatprep.subr.bf16.mxu0 0
  %790 = vmatpush1.bf16.msra.mxu0 0
  %791 = vmatprep.subr.bf16.mxu0 0
  %792 = vmatpush1.bf16.msra.mxu0 0
  %793 = vmatprep.subr.bf16.mxu0 0
  %794 = vmatpush1.bf16.msra.mxu0 0
  %795 = vmatprep.subr.bf16.mxu0 0
  %796 = vmatpush1.bf16.msra.mxu0 0
  %797 = vmatprep.subr.bf16.mxu0 0
  %798 = vmatpush1.bf16.msra.mxu0 0
  %799 = vmatprep.subr.bf16.mxu0 0
  %800 = vmatpush1.bf16.msra.mxu0 0
  %801 = vmatprep.subr.bf16.mxu0 0
  %802 = vmatpush1.bf16.msra.mxu0 0
  %803 = vmatprep.subr.bf16.mxu0 0
  %804 = vmatpush1.bf16.msra.mxu0 %v192
  %805 = vmatprep.subr.bf16.mxu0 0
  %806 = vmatpush2.bf16.msra.mxu0 0
  %807 = vmatprep.subr.bf16.mxu0 0
  %808 = vmatpush2.bf16.msra.mxu0 0
  %809 = vmatprep.subr.bf16.mxu0 0
  %810 = vmatpush2.bf16.msra.mxu0 0
  %811 = vmatprep.subr.bf16.mxu0 0
  %812 = vmatpush2.bf16.msra.mxu0 0
  %813 = vmatprep.subr.bf16.mxu0 0
  %814 = vmatpush2.bf16.msra.mxu0 0
  %815 = vmatprep.subr.bf16.mxu0 0
  %816 = vmatpush2.bf16.msra.mxu0 0
  %817 = vmatprep.subr.bf16.mxu0 0
  %818 = vmatpush2.bf16.msra.mxu0 0
  %819 = vmatprep.subr.bf16.mxu0 0
  %820 = vmatpush2.bf16.msra.mxu0 0
  %821 = vmatprep.mubr.bf16.mxu0 0
  %822 = vmatmul.mubr.bf16.gmra.mxu0 %v787
  %v823 = vpop.f32.mrf.mxu0
  %v824 = vadd.f32 0.0, %v823
  %v825 = vpop.f32.mrf.mxu0
  %v826 = vpop.f32.mrf.mxu0
  %v827 = vpop.f32.mrf.mxu0
  %828 = vdwg.mxu0
  %v830 = vrot.slane %v824, 5
  %831 = vrot.lane.b32.xlu0 %v830, 10
  %v832 = vpop.permute.xlu0 %831
  %v834 = vadd.f32 %v101, %v832
  %v835 = vmax.f32 %v834, 0.0
  %v836 = vpack.c.bf16 %v835, %v835
  %v838 = vshrl.u32 %v836, 16
  %v840 = vrot.slane %v838, 1
  %841 = vrot.lane.b32.xlu0 %v840, 118
  %v842 = vpop.permute.xlu0 %841
  %v844 = vsel %vm62, %v842, 0
  %846 = vmatprep.subr.bf16.mxu0 0
  %847 = vmatpush1.bf16.msra.mxu0 0
  %848 = vmatprep.subr.bf16.mxu0 0
  %849 = vmatpush1.bf16.msra.mxu0 0
  %850 = vmatprep.subr.bf16.mxu0 0
  %851 = vmatpush1.bf16.msra.mxu0 0
  %852 = vmatprep.subr.bf16.mxu0 0
  %853 = vmatpush1.bf16.msra.mxu0 0
  %854 = vmatprep.subr.bf16.mxu0 0
  %855 = vmatpush1.bf16.msra.mxu0 0
  %856 = vmatprep.subr.bf16.mxu0 0
  %857 = vmatpush1.bf16.msra.mxu0 0
  %858 = vmatprep.subr.bf16.mxu0 0
  %859 = vmatpush1.bf16.msra.mxu0 %v253
  %860 = vmatprep.subr.bf16.mxu0 0
  %861 = vmatpush1.bf16.msra.mxu0 %v252
  %862 = vmatprep.subr.bf16.mxu0 0
  %863 = vmatpush2.bf16.msra.mxu0 0
  %864 = vmatprep.subr.bf16.mxu0 0
  %865 = vmatpush2.bf16.msra.mxu0 0
  %866 = vmatprep.subr.bf16.mxu0 0
  %867 = vmatpush2.bf16.msra.mxu0 0
  %868 = vmatprep.subr.bf16.mxu0 0
  %869 = vmatpush2.bf16.msra.mxu0 0
  %870 = vmatprep.subr.bf16.mxu0 0
  %871 = vmatpush2.bf16.msra.mxu0 0
  %872 = vmatprep.subr.bf16.mxu0 0
  %873 = vmatpush2.bf16.msra.mxu0 0
  %874 = vmatprep.subr.bf16.mxu0 0
  %875 = vmatpush2.bf16.msra.mxu0 0
  %876 = vmatprep.subr.bf16.mxu0 0
  %877 = vmatpush2.bf16.msra.mxu0 0
  %878 = vmatprep.mubr.bf16.mxu0 0
  %879 = vmatmul.mubr.bf16.gmra.mxu0 %v844
  %v880 = vpop.f32.mrf.mxu0
  %v881 = vadd.f32 %v39, %v880
  %v882 = vpop.f32.mrf.mxu0
  %v883 = vpop.f32.mrf.mxu0
  %v884 = vpop.f32.mrf.mxu0
  %885 = vdwg.mxu0
  %v886 = vadd.f32 %v881, %v758
  %v887 = vxor.u32 %v886, 2147483648
  %v888 = vmul.f32 %v887, 1.442695
  %v889 = vpow.pop %v888
  %v890 = vadd.f32 %v889, 1.0
  %v891 = vrcp.pop %v890
  %v892 = vmul.f32 1.0, %v891
  %893 = vrot.lane.b32.xlu0 %v758, 64
  %v894 = vpop.permute.xlu0 %893
  %v896 = vmul.f32 %v892, %v894
  %898 = vrot.lane.b32.xlu0 %v896, 64
  %v899 = vpop.permute.xlu0 %898
  %v901 = vadd.f32 %v881, %v899
  %v902 = vtanh.pop %v901
  %v903 = vsub.f32 1.0, %v892
  %905 = vrot.lane.b32.xlu0 %v902, 96
  %v906 = vpop.permute.xlu0 %905
  %v908 = vmul.f32 %v903, %v906
  %v909 = vmul.f32 %v892, %v715
  %v910 = vadd.f32 %v908, %v909
  %v911 = vpack.c.bf16 %v910, %v910
  %913 = vrot.lane.b32.xlu0 %v911, 96
  %v914 = vpop.permute.xlu0 %913
  %v916 = vsel %vm62, %v914, 0
  %918 = vmatprep.subr.bf16.mxu0 0
  %919 = vmatpush1.bf16.msra.mxu0 0
  %920 = vmatprep.subr.bf16.mxu0 0
  %921 = vmatpush1.bf16.msra.mxu0 0
  %922 = vmatprep.subr.bf16.mxu0 0
  %923 = vmatpush1.bf16.msra.mxu0 0
  %924 = vmatprep.subr.bf16.mxu0 0
  %925 = vmatpush1.bf16.msra.mxu0 0
  %926 = vmatprep.subr.bf16.mxu0 0
  %927 = vmatpush1.bf16.msra.mxu0 0
  %928 = vmatprep.subr.bf16.mxu0 0
  %929 = vmatpush1.bf16.msra.mxu0 0
  %930 = vmatprep.subr.bf16.mxu0 0
  %931 = vmatpush1.bf16.msra.mxu0 %v117
  %932 = vmatprep.subr.bf16.mxu0 0
  %933 = vmatpush1.bf16.msra.mxu0 %v116
  %934 = vmatprep.subr.bf16.mxu0 0
  %935 = vmatpush2.bf16.msra.mxu0 0
  %936 = vmatprep.subr.bf16.mxu0 0
  %937 = vmatpush2.bf16.msra.mxu0 0
  %938 = vmatprep.subr.bf16.mxu0 0
  %939 = vmatpush2.bf16.msra.mxu0 0
  %940 = vmatprep.subr.bf16.mxu0 0
  %941 = vmatpush2.bf16.msra.mxu0 0
  %942 = vmatprep.subr.bf16.mxu0 0
  %943 = vmatpush2.bf16.msra.mxu0 0
  %944 = vmatprep.subr.bf16.mxu0 0
  %945 = vmatpush2.bf16.msra.mxu0 0
  %946 = vmatprep.subr.bf16.mxu0 0
  %947 = vmatpush2.bf16.msra.mxu0 0
  %948 = vmatprep.subr.bf16.mxu0 0
  %949 = vmatpush2.bf16.msra.mxu0 0
  %950 = vmatprep.mubr.bf16.mxu0 0
  %951 = vmatmul.mubr.bf16.gmra.mxu0 %v916
  %v952 = vpop.f32.mrf.mxu0
  %v953 = vadd.f32 %v38, %v952
  %v954 = vpop.f32.mrf.mxu0
  %v955 = vpop.f32.mrf.mxu0
  %v956 = vpop.f32.mrf.mxu0
  %957 = vdwg.mxu0
  %v959 = vrot.slane %v953, 4
  %960 = vrot.lane.b32.xlu0 %v959, 32
  %v961 = vpop.permute.xlu0 %960
  %v963 = vadd.f32 %v101, %v961
  %vm964 = vcmask 77828
  %v965 = vsel %vm964, %v963, -inf
  %966 = vmax.xlane.f32.xlu0 %v965
  %v967 = vpop.xlane.xlu0 %966
  %v968 = vsub.f32 %v963, %v967
  %v969 = vmul.f32 %v968, 1.442695
  %v970 = vpow.pop %v969
  %v971 = vsel %vm964, %v970, 0.0
  %972 = vadd.xlane.f32.xlu0 %v971
  %v973 = vpop.xlane.xlu0 %972
  %v974 = vrcp.pop %v973
  %v975 = vmul.f32 %v970, %v974
  %v976 = vpack.c.bf16 %v975, %v975
  %v978 = vrot.slane %v976, 2
  %v980 = vsel %vm186, %v978, 0
  %982 = vmatprep.subr.bf16.mxu0 0
  %983 = vmatpush1.bf16.msra.mxu0 0
  %984 = vmatprep.subr.bf16.mxu0 0
  %985 = vmatpush1.bf16.msra.mxu0 0
  %986 = vmatprep.subr.bf16.mxu0 0
  %987 = vmatpush1.bf16.msra.mxu0 0
  %988 = vmatprep.subr.bf16.mxu0 0
  %989 = vmatpush1.bf16.msra.mxu0 0
  %990 = vmatprep.subr.bf16.mxu0 0
  %991 = vmatpush1.bf16.msra.mxu0 0
  %992 = vmatprep.subr.bf16.mxu0 0
  %993 = vmatpush1.bf16.msra.mxu0 0
  %994 = vmatprep.subr.bf16.mxu0 0
  %995 = vmatpush1.bf16.msra.mxu0 0
  %996 = vmatprep.subr.bf16.mxu0 0
  %997 = vmatpush1.bf16.msra.mxu0 %v192
  %998 = vmatprep.subr.bf16.mxu0 0
  %999 = vmatpush2.bf16.msra.mxu0 0
  %1000 = vmatprep.subr.bf16.mxu0 0
  %1001 = vmatpush2.bf16.msra.mxu0 0
  %1002 = vmatprep.subr.bf16.mxu0 0
  %1003 = vmatpush2.bf16.msra.mxu0 0
  %1004 = vmatprep.subr.bf16.mxu0 0
  %1005 = vmatpush2.bf16.msra.mxu0 0
  %1006 = vmatprep.subr.bf16.mxu0 0
  %1007 = vmatpush2.bf16.msra.mxu0 0
  %1008 = vmatprep.subr.bf16.mxu0 0
  %1009 = vmatpush2.bf16.msra.mxu0 0
  %1010 = vmatprep.subr.bf16.mxu0 0
  %1011 = vmatpush2.bf16.msra.mxu0 0
  %1012 = vmatprep.subr.bf16.mxu0 0
  %1013 = vmatpush2.bf16.msra.mxu0 0
  %1014 = vmatprep.mubr.bf16.mxu0 0
  %1015 = vmatmul.mubr.bf16.gmra.mxu0 %v980
  %v1016 = vpop.f32.mrf.mxu0
  %v1017 = vadd.f32 0.0, %v1016
  %v1018 = vpop.f32.mrf.mxu0
  %v1019 = vpop.f32.mrf.mxu0
  %v1020 = vpop.f32.mrf.mxu0
  %1021 = vdwg.mxu0
  %v1023 = vrot.slane %v1017, 4
  %1024 = vrot.lane.b32.xlu0 %v1023, 10
  %v1025 = vpop.permute.xlu0 %1024
  %v1027 = vadd.f32 %v101, %v1025
  %v1028 = vmax.f32 %v1027, 0.0
  %v1029 = vpack.c.bf16 %v1028, %v1028
  %v1031 = vrot.slane %v1029, 2
  %1032 = vrot.lane.b32.xlu0 %v1031, 118
  %v1033 = vpop.permute.xlu0 %1032
  %v1035 = vsel %vm62, %v1033, 0
  %1037 = vmatprep.subr.bf16.mxu0 0
  %1038 = vmatpush1.bf16.msra.mxu0 0
  %1039 = vmatprep.subr.bf16.mxu0 0
  %1040 = vmatpush1.bf16.msra.mxu0 0
  %1041 = vmatprep.subr.bf16.mxu0 0
  %1042 = vmatpush1.bf16.msra.mxu0 0
  %1043 = vmatprep.subr.bf16.mxu0 0
  %1044 = vmatpush1.bf16.msra.mxu0 0
  %1045 = vmatprep.subr.bf16.mxu0 0
  %1046 = vmatpush1.bf16.msra.mxu0 0
  %1047 = vmatprep.subr.bf16.mxu0 0
  %1048 = vmatpush1.bf16.msra.mxu0 0
  %1049 = vmatprep.subr.bf16.mxu0 0
  %1050 = vmatpush1.bf16.msra.mxu0 %v253
  %1051 = vmatprep.subr.bf16.mxu0 0
  %1052 = vmatpush1.bf16.msra.mxu0 %v252
  %1053 = vmatprep.subr.bf16.mxu0 0
  %1054 = vmatpush2.bf16.msra.mxu0 0
  %1055 = vmatprep.subr.bf16.mxu0 0
  %1056 = vmatpush2.bf16.msra.mxu0 0
  %1057 = vmatprep.subr.bf16.mxu0 0
  %1058 = vmatpush2.bf16.msra.mxu0 0
  %1059 = vmatprep.subr.bf16.mxu0 0
  %1060 = vmatpush2.bf16.msra.mxu0 0
  %1061 = vmatprep.subr.bf16.mxu0 0
  %1062 = vmatpush2.bf16.msra.mxu0 0
  %1063 = vmatprep.subr.bf16.mxu0 0
  %1064 = vmatpush2.bf16.msra.mxu0 0
  %1065 = vmatprep.subr.bf16.mxu0 0
  %1066 = vmatpush2.bf16.msra.mxu0 0
  %1067 = vmatprep.subr.bf16.mxu0 0
  %1068 = vmatpush2.bf16.msra.mxu0 0
  %1069 = vmatprep.mubr.bf16.mxu0 0
  %1070 = vmatmul.mubr.bf16.gmra.mxu0 %v1035
  %v1071 = vpop.f32.mrf.mxu0
  %v1072 = vadd.f32 %v39, %v1071
  %v1073 = vpop.f32.mrf.mxu0
  %v1074 = vpop.f32.mrf.mxu0
  %v1075 = vpop.f32.mrf.mxu0
  %1076 = vdwg.mxu0
  %v1077 = vadd.f32 %v1072, %v953
  %v1078 = vxor.u32 %v1077, 2147483648
  %v1079 = vmul.f32 %v1078, 1.442695
  %v1080 = vpow.pop %v1079
  %v1081 = vadd.f32 %v1080, 1.0
  %v1082 = vrcp.pop %v1081
  %v1083 = vmul.f32 1.0, %v1082
  %1084 = vrot.lane.b32.xlu0 %v953, 64
  %v1085 = vpop.permute.xlu0 %1084
  %v1087 = vmul.f32 %v1083, %v1085
  %1089 = vrot.lane.b32.xlu0 %v1087, 64
  %v1090 = vpop.permute.xlu0 %1089
  %v1092 = vadd.f32 %v1072, %v1090
  %v1093 = vtanh.pop %v1092
  %v1094 = vsub.f32 1.0, %v1083
  %1096 = vrot.lane.b32.xlu0 %v1093, 96
  %v1097 = vpop.permute.xlu0 %1096
  %v1099 = vmul.f32 %v1094, %v1097
  %v1100 = vmul.f32 %v1083, %v910
  %v1101 = vadd.f32 %v1099, %v1100
  %v1102 = vpack.c.bf16 %v1101, %v1101
  %1104 = vrot.lane.b32.xlu0 %v1102, 96
  %v1105 = vpop.permute.xlu0 %1104
  %v1107 = vsel %vm62, %v1105, 0
  %1109 = vmatprep.subr.bf16.mxu0 0
  %1110 = vmatpush1.bf16.msra.mxu0 0
  %1111 = vmatprep.subr.bf16.mxu0 0
  %1112 = vmatpush1.bf16.msra.mxu0 0
  %1113 = vmatprep.subr.bf16.mxu0 0
  %1114 = vmatpush1.bf16.msra.mxu0 0
  %1115 = vmatprep.subr.bf16.mxu0 0
  %1116 = vmatpush1.bf16.msra.mxu0 0
  %1117 = vmatprep.subr.bf16.mxu0 0
  %1118 = vmatpush1.bf16.msra.mxu0 0
  %1119 = vmatprep.subr.bf16.mxu0 0
  %1120 = vmatpush1.bf16.msra.mxu0 0
  %1121 = vmatprep.subr.bf16.mxu0 0
  %1122 = vmatpush1.bf16.msra.mxu0 %v117
  %1123 = vmatprep.subr.bf16.mxu0 0
  %1124 = vmatpush1.bf16.msra.mxu0 %v116
  %1125 = vmatprep.subr.bf16.mxu0 0
  %1126 = vmatpush2.bf16.msra.mxu0 0
  %1127 = vmatprep.subr.bf16.mxu0 0
  %1128 = vmatpush2.bf16.msra.mxu0 0
  %1129 = vmatprep.subr.bf16.mxu0 0
  %1130 = vmatpush2.bf16.msra.mxu0 0
  %1131 = vmatprep.subr.bf16.mxu0 0
  %1132 = vmatpush2.bf16.msra.mxu0 0
  %1133 = vmatprep.subr.bf16.mxu0 0
  %1134 = vmatpush2.bf16.msra.mxu0 0
  %1135 = vmatprep.subr.bf16.mxu0 0
  %1136 = vmatpush2.bf16.msra.mxu0 0
  %1137 = vmatprep.subr.bf16.mxu0 0
  %1138 = vmatpush2.bf16.msra.mxu0 0
  %1139 = vmatprep.subr.bf16.mxu0 0
  %1140 = vmatpush2.bf16.msra.mxu0 0
  %1141 = vmatprep.mubr.bf16.mxu0 0
  %1142 = vmatmul.mubr.bf16.gmra.mxu0 %v1107
  %v1143 = vpop.f32.mrf.mxu0
  %v1144 = vadd.f32 %v38, %v1143
  %v1145 = vpop.f32.mrf.mxu0
  %v1146 = vpop.f32.mrf.mxu0
  %v1147 = vpop.f32.mrf.mxu0
  %1148 = vdwg.mxu0
  %v1150 = vrot.slane %v1144, 3
  %1151 = vrot.lane.b32.xlu0 %v1150, 32
  %v1152 = vpop.permute.xlu0 %1151
  %v1154 = vadd.f32 %v101, %v1152
  %vm1155 = vcmask 78853
  %v1156 = vsel %vm1155, %v1154, -inf
  %1157 = vmax.xlane.f32.xlu0 %v1156
  %v1158 = vpop.xlane.xlu0 %1157
  %v1159 = vsub.f32 %v1154, %v1158
  %v1160 = vmul.f32 %v1159, 1.442695
  %v1161 = vpow.pop %v1160
  %v1162 = vsel %vm1155, %v1161, 0.0
  %1163 = vadd.xlane.f32.xlu0 %v1162
  %v1164 = vpop.xlane.xlu0 %1163
  %v1165 = vrcp.pop %v1164
  %v1166 = vmul.f32 %v1161, %v1165
  %v1167 = vpack.c.bf16 %v1166, %v1166
  %v1169 = vshrl.u32 %v1167, 16
  %v1171 = vrot.slane %v1169, 2
  %v1173 = vsel %vm186, %v1171, 0
  %1175 = vmatprep.subr.bf16.mxu0 0
  %1176 = vmatpush1.bf16.msra.mxu0 0
  %1177 = vmatprep.subr.bf16.mxu0 0
  %1178 = vmatpush1.bf16.msra.mxu0 0
  %1179 = vmatprep.subr.bf16.mxu0 0
  %1180 = vmatpush1.bf16.msra.mxu0 0
  %1181 = vmatprep.subr.bf16.mxu0 0
  %1182 = vmatpush1.bf16.msra.mxu0 0
  %1183 = vmatprep.subr.bf16.mxu0 0
  %1184 = vmatpush1.bf16.msra.mxu0 0
  %1185 = vmatprep.subr.bf16.mxu0 0
  %1186 = vmatpush1.bf16.msra.mxu0 0
  %1187 = vmatprep.subr.bf16.mxu0 0
  %1188 = vmatpush1.bf16.msra.mxu0 0
  %1189 = vmatprep.subr.bf16.mxu0 0
  %1190 = vmatpush1.bf16.msra.mxu0 %v192
  %1191 = vmatprep.subr.bf16.mxu0 0
  %1192 = vmatpush2.bf16.msra.mxu0 0
  %1193 = vmatprep.subr.bf16.mxu0 0
  %1194 = vmatpush2.bf16.msra.mxu0 0
  %1195 = vmatprep.subr.bf16.mxu0 0
  %1196 = vmatpush2.bf16.msra.mxu0 0
  %1197 = vmatprep.subr.bf16.mxu0 0
  %1198 = vmatpush2.bf16.msra.mxu0 0
  %1199 = vmatprep.subr.bf16.mxu0 0
  %1200 = vmatpush2.bf16.msra.mxu0 0
  %1201 = vmatprep.subr.bf16.mxu0 0
  %1202 = vmatpush2.bf16.msra.mxu0 0
  %1203 = vmatprep.subr.bf16.mxu0 0
  %1204 = vmatpush2.bf16.msra.mxu0 0
  %1205 = vmatprep.subr.bf16.mxu0 0
  %1206 = vmatpush2.bf16.msra.mxu0 0
  %1207 = vmatprep.mubr.bf16.mxu0 0
  %1208 = vmatmul.mubr.bf16.gmra.mxu0 %v1173
  %v1209 = vpop.f32.mrf.mxu0
  %v1210 = vadd.f32 0.0, %v1209
  %v1211 = vpop.f32.mrf.mxu0
  %v1212 = vpop.f32.mrf.mxu0
  %v1213 = vpop.f32.mrf.mxu0
  %1214 = vdwg.mxu0
  %v1216 = vrot.slane %v1210, 3
  %1217 = vrot.lane.b32.xlu0 %v1216, 10
  %v1218 = vpop.permute.xlu0 %1217
  %v1220 = vadd.f32 %v101, %v1218
  %v1221 = vmax.f32 %v1220, 0.0
  %v1222 = vpack.c.bf16 %v1221, %v1221
  %v1224 = vshrl.u32 %v1222, 16
  %v1226 = vrot.slane %v1224, 2
  %1227 = vrot.lane.b32.xlu0 %v1226, 118
  %v1228 = vpop.permute.xlu0 %1227
  %v1230 = vsel %vm62, %v1228, 0
  %1232 = vmatprep.subr.bf16.mxu0 0
  %1233 = vmatpush1.bf16.msra.mxu0 0
  %1234 = vmatprep.subr.bf16.mxu0 0
  %1235 = vmatpush1.bf16.msra.mxu0 0
  %1236 = vmatprep.subr.bf16.mxu0 0
  %1237 = vmatpush1.bf16.msra.mxu0 0
  %1238 = vmatprep.subr.bf16.mxu0 0
  %1239 = vmatpush1.bf16.msra.mxu0 0
  %1240 = vmatprep.subr.bf16.mxu0 0
  %1241 = vmatpush1.bf16.msra.mxu0 0
  %1242 = vmatprep.subr.bf16.mxu0 0
  %1243 = vmatpush1.bf16.msra.mxu0 0
  %1244 = vmatprep.subr.bf16.mxu0 0
  %1245 = vmatpush1.bf16.msra.mxu0 %v253
  %1246 = vmatprep.subr.bf16.mxu0 0
  %1247 = vmatpush1.bf16.msra.mxu0 %v252
  %1248 = vmatprep.subr.bf16.mxu0 0
  %1249 = vmatpush2.bf16.msra.mxu0 0
  %1250 = vmatprep.subr.bf16.mxu0 0
  %1251 = vmatpush2.bf16.msra.mxu0 0
  %1252 = vmatprep.subr.bf16.mxu0 0
  %1253 = vmatpush2.bf16.msra.mxu0 0
  %1254 = vmatprep.subr.bf16.mxu0 0
  %1255 = vmatpush2.bf16.msra.mxu0 0
  %1256 = vmatprep.subr.bf16.mxu0 0
  %1257 = vmatpush2.bf16.msra.mxu0 0
  %1258 = vmatprep.subr.bf16.mxu0 0
  %1259 = vmatpush2.bf16.msra.mxu0 0
  %1260 = vmatprep.subr.bf16.mxu0 0
  %1261 = vmatpush2.bf16.msra.mxu0 0
  %1262 = vmatprep.subr.bf16.mxu0 0
  %1263 = vmatpush2.bf16.msra.mxu0 0
  %1264 = vmatprep.mubr.bf16.mxu0 0
  %1265 = vmatmul.mubr.bf16.gmra.mxu0 %v1230
  %v1266 = vpop.f32.mrf.mxu0
  %v1267 = vadd.f32 %v39, %v1266
  %v1268 = vpop.f32.mrf.mxu0
  %v1269 = vpop.f32.mrf.mxu0
  %v1270 = vpop.f32.mrf.mxu0
  %1271 = vdwg.mxu0
  %v1272 = vadd.f32 %v1267, %v1144
  %v1273 = vxor.u32 %v1272, 2147483648
  %v1274 = vmul.f32 %v1273, 1.442695
  %v1275 = vpow.pop %v1274
  %v1276 = vadd.f32 %v1275, 1.0
  %v1277 = vrcp.pop %v1276
  %v1278 = vmul.f32 1.0, %v1277
  %1279 = vrot.lane.b32.xlu0 %v1144, 64
  %v1280 = vpop.permute.xlu0 %1279
  %v1282 = vmul.f32 %v1278, %v1280
  %1284 = vrot.lane.b32.xlu0 %v1282, 64
  %v1285 = vpop.permute.xlu0 %1284
  %v1287 = vadd.f32 %v1267, %v1285
  %v1288 = vtanh.pop %v1287
  %v1289 = vsub.f32 1.0, %v1278
  %1291 = vrot.lane.b32.xlu0 %v1288, 96
  %v1292 = vpop.permute.xlu0 %1291
  %v1294 = vmul.f32 %v1289, %v1292
  %v1295 = vmul.f32 %v1278, %v1101
  %v1296 = vadd.f32 %v1294, %v1295
  %v1298 = vrot.slane %v524, 7
  %v1301 = vrot.slane %v715, 6
  %v1304 = vrot.slane %v910, 5
  %v1307 = vrot.slane %v1101, 4
  %v1310 = vrot.slane %v1296, 3
  %vm1312 = vcmask 1040384
  %v1313 = vsel %vm1312, %v331, %v1298
  %vm1314 = vcmask 1041408
  %v1315 = vsel %vm1314, %v1313, %v1301
  %vm1316 = vcmask 1042432
  %v1317 = vsel %vm1316, %v1315, %v1304
  %vm1318 = vcmask 1043456
  %v1319 = vsel %vm1318, %v1317, %v1307
  %v1320 = vsel %vm190, %v1319, %v1310
  %v1321 = vsel %vm1312, %v179, %v396
  %v1322 = vsel %vm1314, %v1321, %v589
  %v1323 = vsel %vm1316, %v1322, %v780
  %v1324 = vsel %vm1318, %v1323, %v975
  %v1325 = vsel %vm190, %v1324, %v1166
  %v1326 = vpack.c.bf16 %v1320, %v1320
  %v1328 = vlaneseq
  %v1329 = vshrl.u32 %v1328, 7
  %v1330 = vsub.s32 0, %v1329
  %v1331 = vrot.slane %v40, %v1330
  %1334 = vrot.lane.b32.xlu0 %v1326, 96
  %v1335 = vpop.permute.xlu0 %1334
  %v1340 = vunpack.c.l.b16 %v33
  %v1341 = vunpack.c.l.b16 %v34
  %v1342 = vunpack.c.l.b16 %v35
  %v1343 = vunpack.c.l.b16 %v36
  %v1344 = vpack.c.b16 %v1341, %v1340
  %v1345 = vpack.c.b16 %v1343, %v1342
  %v1349 = vsel %vm62, %v1335, 0
  %1351 = vmatprep.subr.bf16.mxu0 0
  %1352 = vmatpush1.bf16.msra.mxu0 0
  %1353 = vmatprep.subr.bf16.mxu0 0
  %1354 = vmatpush1.bf16.msra.mxu0 0
  %1355 = vmatprep.subr.bf16.mxu0 0
  %1356 = vmatpush1.bf16.msra.mxu0 0
  %1357 = vmatprep.subr.bf16.mxu0 0
  %1358 = vmatpush1.bf16.msra.mxu0 0
  %1359 = vmatprep.subr.bf16.mxu0 0
  %1360 = vmatpush1.bf16.msra.mxu0 0
  %1361 = vmatprep.subr.bf16.mxu0 0
  %1362 = vmatpush1.bf16.msra.mxu0 0
  %1363 = vmatprep.subr.bf16.mxu0 0
  %1364 = vmatpush1.bf16.msra.mxu0 %v1345
  %1365 = vmatprep.subr.bf16.mxu0 0
  %1366 = vmatpush1.bf16.msra.mxu0 %v1344
  %1367 = vmatprep.subr.bf16.mxu0 0
  %1368 = vmatpush2.bf16.msra.mxu0 0
  %1369 = vmatprep.subr.bf16.mxu0 0
  %1370 = vmatpush2.bf16.msra.mxu0 0
  %1371 = vmatprep.subr.bf16.mxu0 0
  %1372 = vmatpush2.bf16.msra.mxu0 0
  %1373 = vmatprep.subr.bf16.mxu0 0
  %1374 = vmatpush2.bf16.msra.mxu0 0
  %1375 = vmatprep.subr.bf16.mxu0 0
  %1376 = vmatpush2.bf16.msra.mxu0 0
  %1377 = vmatprep.subr.bf16.mxu0 0
  %1378 = vmatpush2.bf16.msra.mxu0 0
  %1379 = vmatprep.subr.bf16.mxu0 0
  %1380 = vmatpush2.bf16.msra.mxu0 0
  %1381 = vmatprep.subr.bf16.mxu0 0
  %1382 = vmatpush2.bf16.msra.mxu0 0
  %1383 = vmatprep.mubr.bf16.mxu0 0
  %1384 = vmatmul.mubr.bf16.gmra.mxu0 %v1349
  %v1385 = vpop.f32.mrf.mxu0
  %v1386 = vadd.f32 %v1331, %v1385
  %v1387 = vpop.f32.mrf.mxu0
  %v1388 = vpop.f32.mrf.mxu0
  %v1389 = vpop.f32.mrf.mxu0
  %1390 = vdwg.mxu0
  %vm1391 = vcmask 521216
  %v1392 = vsel %vm1391, %v1386, -inf
  %1393 = vmax.xlane.f32.xlu0 %v1392
  %v1394 = vpop.xlane.xlu0 %1393
  %v1395 = vsub.f32 %v1386, %v1394
  %v1396 = vmul.f32 %v1395, 1.442695
  %v1397 = vpow.pop %v1396
  %v1398 = vsel %vm1391, %v1397, 0.0
  %1399 = vadd.xlane.f32.xlu0 %v1398
  %v1400 = vpop.xlane.xlu0 %1399
  %v1401 = vlog2.pop %v1400
  %v1402 = vmul.f32 %v1401, 0.6931472
  %v1403 = vsub.f32 %v1395, %v1402
  %1405 = vrot.lane.b32.xlu0 %v1320, 32
  %v1406 = vpop.permute.xlu0 %1405
  %1409 = vrot.lane.b32.xlu0 %v1325, 96
  %v1410 = vpop.permute.xlu0 %1409
  %vm1412 = vcmask 523264
  %v1413 = vsel %vm1412, %v1403, %v1406
  %vm1414 = vcmask 785408
  %v1415 = vsel %vm1414, %v1413, %v1410
  %vm1416 = vcmask 867328
  %v1417 = vsel %vm1416, %v1415, 0.0
  %1418 = vst [vmem:[%s5] sm:$0x3f] %v1417
  // Predicated region
  $region22: #{attn_decoder_forward_seq.1} parent=0 // pred_check
    _
  $region23: #{attn_decoder_forward_seq.1} parent=0 // pred_check_branch
    %1420 = sbr.rel (0) target = $region25
  $region24: #{attn_decoder_forward_seq.1} parent=0 // pred_region
    _
  $region25: #{attn_decoder_forward_seq.1} parent=0 // pred_fallthru
    _
  // Predicated region
  $region26: #{attn_decoder_forward_seq.1} parent=0 // pred_check
    _
  $region27: #{attn_decoder_forward_seq.1} parent=0 // pred_check_branch
    %1422 = sbr.rel (0) target = $region29
  $region28: #{attn_decoder_forward_seq.1} parent=0 // pred_region
    _
  $region29: #{attn_decoder_forward_seq.1} parent=0 // pred_fallthru
    _

</llo_original>
